<compile_context>
chip_gen: v5e
topology: v5e:2x2
jax: 0.10.0
libtpu: 0.0.40
codegen_flags: <defaults>
</compile_context>

<pallas_src>
import jax
import jax.numpy as jnp
from jax.experimental import pallas as pl
from jax.experimental.pallas import tpu as pltpu

H_IN = 768       # bert-base hidden size
H_MID = 512      # fc1 out
N_CLS = 2        # fc2 out (real classes)
N_PAD = 128      # lane-dense padded class dim for the fc2 MXU matmul
N_OUT = 8        # narrow output slab actually written back to HBM
NEG_BIG = -1e30  # padding bias -> exp() == 0, never selected by max


def bertda_head_kernel(x_ref, w1_ref, b1_ref, w2_ref, b2_ref, o_ref):
    # x_ref:  [TB, 768] f32    w1_ref: [768, 512] bf16   b1_ref: [1, 512] f32
    # w2_ref: [512, 128] bf16  b2_ref: [1, 128] f32 (cols >= 2 are -1e30)
    # o_ref:  [TB, 8] f32 (only cols [:2] are meaningful)

    # In-kernel bf16 cast (VPU) — avoids an extra wrapper-side HBM pass.
    x_bf = x_ref[...].astype(jnp.bfloat16)

    # fc1 (bf16 x bf16, f32 accumulate) + bias + ReLU; dropout = identity.
    h = jnp.dot(x_bf, w1_ref[...],
                preferred_element_type=jnp.float32) + b1_ref[...]
    h = jnp.maximum(h, 0.0)

    # fc2 in bf16 on the lane-dense zero-padded weight: [TB,512] x [512,128].
    # Bias (with -1e30 on padded columns) is added in f32 so padding is exact.
    logits = jnp.dot(h.astype(jnp.bfloat16), w2_ref[...],
                     preferred_element_type=jnp.float32) + b2_ref[...]

    # LogSoftmax over the class axis. Padded columns carry -1e30 bias, so the
    # row max comes from the real logits and their exp() contributes 0.
    m = jnp.max(logits, axis=1, keepdims=True)
    z = logits - m
    lse = jnp.log(jnp.sum(jnp.exp(z), axis=1, keepdims=True))

    # Only write the first N_OUT columns back to HBM (16x less writeback).
    o_ref[...] = (z[:, :N_OUT] - lse).astype(o_ref.dtype)


def bertda_head(cls_hs, w1, b1, w2, b2, *, tb=512):
    """cls_hs: [B, 768].  w1: [768, 512], b1: [512], w2: [512, 2], b2: [2]."""
    B = cls_hs.shape[0]
    # Single full-batch block for small B; otherwise tb (multiple of 8/256)
    # with a ragged last block handled by Pallas (no wrapper pad pass).
    tb_eff = B if B <= tb else tb
    n_tiles = pl.cdiv(B, tb_eff)

    x = cls_hs.astype(jnp.float32)          # fed as-is; bf16 cast in-kernel
    w1_bf = w1.astype(jnp.bfloat16)
    b1_2d = b1.reshape(1, H_MID).astype(jnp.float32)

    # Lane-dense fc2 weights in bf16 (zero-pad N from 2 -> 128); bias in f32
    # with -1e30 on the padded columns.
    w2_pad = jnp.zeros((H_MID, N_PAD), jnp.bfloat16).at[:, :N_CLS].set(
        w2.astype(jnp.bfloat16))
    b2_pad = jnp.full((1, N_PAD), NEG_BIG, jnp.float32).at[0, :N_CLS].set(
        b2.astype(jnp.float32))

    cost = pl.CostEstimate(
        flops=2 * B * H_IN * H_MID + 2 * B * H_MID * N_PAD,
        transcendentals=B * N_PAD,
        bytes_accessed=(x.size * 4 + w1_bf.size * 2 + w2_pad.size * 2
                        + b1_2d.size * 4 + b2_pad.size * 4 + B * N_OUT * 4))

    out = pl.pallas_call(
        bertda_head_kernel,
        out_shape=jax.ShapeDtypeStruct((B, N_OUT), jnp.float32),
        grid_spec=pltpu.PrefetchScalarGridSpec(
            num_scalar_prefetch=0,
            grid=(n_tiles,),
            in_specs=[
                pl.BlockSpec((tb_eff, H_IN), lambda i: (i, 0)),      # cls_hs tile
                pl.BlockSpec((H_IN, H_MID), lambda i: (0, 0)),       # W1 (resident)
                pl.BlockSpec((1, H_MID), lambda i: (0, 0)),          # b1
                pl.BlockSpec((H_MID, N_PAD), lambda i: (0, 0)),      # W2 (padded)
                pl.BlockSpec((1, N_PAD), lambda i: (0, 0)),          # b2 (padded)
            ],
            out_specs=pl.BlockSpec((tb_eff, N_OUT), lambda i: (i, 0)),
        ),
        compiler_params=pltpu.CompilerParams(
            dimension_semantics=("parallel",)),
        cost_estimate=cost,
    )(x, w1_bf, b1_2d, w2_pad, b2_pad)

    return out[:, :N_CLS]


def bertda_head_ref(cls_hs, w1, b1, w2, b2):
    h = jnp.maximum(cls_hs @ w1 + b1, 0.0)
    logits = h @ w2 + b2
    return jax.nn.log_softmax(logits, axis=1)


if __name__ == "__main__":
    key = jax.random.PRNGKey(0)
    k_x, k_w1, k_b1, k_w2, k_b2 = jax.random.split(key, 5)

    B = 16  # small batch for the test
    # Pooled CLS hidden states that the external BERT would produce.
    cls_hs = jax.random.normal(k_x, (B, H_IN), dtype=jnp.float32)

    # PyTorch stores Linear weight as [out, in]; transpose to [in, out].
    w1_pt = jax.random.normal(k_w1, (H_MID, H_IN), dtype=jnp.float32) * 0.02
    b1 = jax.random.normal(k_b1, (H_MID,), dtype=jnp.float32) * 0.02
    w2_pt = jax.random.normal(k_w2, (N_CLS, H_MID), dtype=jnp.float32) * 0.02
    b2 = jax.random.normal(k_b2, (N_CLS,), dtype=jnp.float32) * 0.02
    w1 = w1_pt.T  # [768, 512]
    w2 = w2_pt.T  # [512, 2]

    out = jax.block_until_ready(bertda_head(cls_hs, w1, b1, w2, b2))
    ref = bertda_head_ref(cls_hs, w1, b1, w2, b2)
    assert out.shape == (B, N_CLS)
    # bf16 fc1/fc2 inputs -> relaxed tolerance vs. the f32 reference.
    assert jnp.allclose(out, ref, atol=3e-2, rtol=3e-2), "mismatch vs reference"

    # Exercise the ragged-last-block path (no wrapper pad): B not a multiple
    # of the batch tile.
    B2 = 20
    cls2 = jax.random.normal(jax.random.PRNGKey(1), (B2, H_IN), jnp.float32)
    out2 = jax.block_until_ready(bertda_head(cls2, w1, b1, w2, b2, tb=8))
    ref2 = bertda_head_ref(cls2, w1, b1, w2, b2)
    assert out2.shape == (B2, N_CLS)
    assert jnp.allclose(out2, ref2, atol=3e-2, rtol=3e-2), "ragged mismatch"

    print("KERNEL_OK")
</pallas_src>

<mosaic_0001>
module attributes {stable_mosaic.version = 11 : i64} {
  func.func @bertda_head_kernel(%arg0: i32, %arg1: memref<16x768xf32, #tpu.memory_space<vmem>>, %arg2: memref<768x512xbf16, #tpu.memory_space<vmem>>, %arg3: memref<1x512xf32, #tpu.memory_space<vmem>>, %arg4: memref<512x128xbf16, #tpu.memory_space<vmem>>, %arg5: memref<1x128xf32, #tpu.memory_space<vmem>>, %arg6: memref<16x8xf32, #tpu.memory_space<vmem>>) attributes {dimension_semantics = [#tpu.dimension_semantics<parallel>], iteration_bounds = array<i64: 1>, scalar_prefetch = 0 : i64, scratch_operands = 0 : i64, tpu.core_type = #tpu.core_type<tc>, window_params = [{transform_indices = @transform_0, window_bounds = array<i64: 16, 768>}, {pipeline_mode = #tpu.pipeline_mode<synchronous>, transform_indices = @transform_1, window_bounds = array<i64: 768, 512>}, {pipeline_mode = #tpu.pipeline_mode<synchronous>, transform_indices = @transform_2, window_bounds = array<i64: 1, 512>}, {pipeline_mode = #tpu.pipeline_mode<synchronous>, transform_indices = @transform_3, window_bounds = array<i64: 512, 128>}, {pipeline_mode = #tpu.pipeline_mode<synchronous>, transform_indices = @transform_4, window_bounds = array<i64: 1, 128>}, {transform_indices = @transform_5, window_bounds = array<i64: 16, 8>}]} {
    %c0 = arith.constant 0 : index
    %c0_0 = arith.constant 0 : index
    %0 = vector.load %arg1[%c0, %c0_0] : memref<16x768xf32, #tpu.memory_space<vmem>>, vector<16x768xf32>
    %1 = arith.truncf %0 : vector<16x768xf32> to vector<16x768xbf16>
    %c0_1 = arith.constant 0 : index
    %c0_2 = arith.constant 0 : index
    %2 = vector.load %arg2[%c0_1, %c0_2] : memref<768x512xbf16, #tpu.memory_space<vmem>>, vector<768x512xbf16>
    %cst = arith.constant dense<0.000000e+00> : vector<16x512xf32>
    %3 = tpu.matmul %1, %2, %cst {dimension_numbers = #tpu.dot_dimension_numbers<[1], [0], [0], [1], [0, 0, 1, 1], [], []>} : vector<16x768xbf16>, vector<768x512xbf16>, vector<16x512xf32> -> vector<16x512xf32>
    %c0_3 = arith.constant 0 : index
    %c0_4 = arith.constant 0 : index
    %4 = vector.load %arg3[%c0_3, %c0_4] : memref<1x512xf32, #tpu.memory_space<vmem>>, vector<1x512xf32>
    %5 = vector.broadcast %4 : vector<1x512xf32> to vector<16x512xf32>
    %6 = arith.addf %3, %5 : vector<16x512xf32>
    %cst_5 = arith.constant 0.000000e+00 : f32
    %7 = vector.broadcast %cst_5 : f32 to vector<16x512xf32>
    %8 = arith.maximumf %6, %7 : vector<16x512xf32>
    %9 = arith.truncf %8 : vector<16x512xf32> to vector<16x512xbf16>
    %c0_6 = arith.constant 0 : index
    %c0_7 = arith.constant 0 : index
    %10 = vector.load %arg4[%c0_6, %c0_7] : memref<512x128xbf16, #tpu.memory_space<vmem>>, vector<512x128xbf16>
    %cst_8 = arith.constant dense<0.000000e+00> : vector<16x128xf32>
    %11 = tpu.matmul %9, %10, %cst_8 {dimension_numbers = #tpu.dot_dimension_numbers<[1], [0], [0], [1], [0, 0, 1, 1], [], []>} : vector<16x512xbf16>, vector<512x128xbf16>, vector<16x128xf32> -> vector<16x128xf32>
    %c0_9 = arith.constant 0 : index
    %c0_10 = arith.constant 0 : index
    %12 = vector.load %arg5[%c0_9, %c0_10] : memref<1x128xf32, #tpu.memory_space<vmem>>, vector<1x128xf32>
    %13 = vector.broadcast %12 : vector<1x128xf32> to vector<16x128xf32>
    %14 = arith.addf %11, %13 : vector<16x128xf32>
    %cst_11 = arith.constant dense<0xFF800000> : vector<16xf32>
    %15 = vector.multi_reduction <maximumf>, %14, %cst_11 [1] : vector<16x128xf32> to vector<16xf32>
    %16 = vector.shape_cast %15 : vector<16xf32> to vector<16x1xf32>
    %17 = vector.broadcast %16 : vector<16x1xf32> to vector<16x128xf32>
    %18 = arith.subf %14, %17 : vector<16x128xf32>
    %19 = math.exp %18 : vector<16x128xf32>
    %cst_12 = arith.constant dense<0.000000e+00> : vector<16xf32>
    %20 = vector.multi_reduction <add>, %19, %cst_12 [1] : vector<16x128xf32> to vector<16xf32>
    %21 = vector.shape_cast %20 : vector<16xf32> to vector<16x1xf32>
    %22 = math.log %21 : vector<16x1xf32>
    %23 = vector.extract_strided_slice %18 {offsets = [0, 0], sizes = [16, 8], strides = [1, 1]} : vector<16x128xf32> to vector<16x8xf32>
    %24 = vector.broadcast %22 : vector<16x1xf32> to vector<16x8xf32>
    %25 = arith.subf %23, %24 : vector<16x8xf32>
    %c0_13 = arith.constant 0 : index
    %c0_14 = arith.constant 0 : index
    %26 = vector.load %arg6[%c0_13, %c0_14] : memref<16x8xf32, #tpu.memory_space<vmem>>, vector<16x8xf32>
    tpu.vector_store %arg6[%c0_13, %c0_14], %25 {strides = array<i32>} : memref<16x8xf32, #tpu.memory_space<vmem>>, vector<16x8xf32>,
    return
  }
  func.func @transform_0(%arg0: i32) -> (i32, i32) {
    %c0_i32 = arith.constant 0 : i32
    %c0_i32_0 = arith.constant 0 : i32
    return %arg0, %c0_i32 : i32, i32
  }
  func.func @transform_1(%arg0: i32) -> (i32, i32) {
    %c0_i32 = arith.constant 0 : i32
    %c0_i32_0 = arith.constant 0 : i32
    %c0_i32_1 = arith.constant 0 : i32
    return %c0_i32, %c0_i32_0 : i32, i32
  }
  func.func @transform_2(%arg0: i32) -> (i32, i32) {
    %c0_i32 = arith.constant 0 : i32
    %c0_i32_0 = arith.constant 0 : i32
    %c0_i32_1 = arith.constant 0 : i32
    return %c0_i32, %c0_i32_0 : i32, i32
  }
  func.func @transform_3(%arg0: i32) -> (i32, i32) {
    %c0_i32 = arith.constant 0 : i32
    %c0_i32_0 = arith.constant 0 : i32
    %c0_i32_1 = arith.constant 0 : i32
    return %c0_i32, %c0_i32_0 : i32, i32
  }
  func.func @transform_4(%arg0: i32) -> (i32, i32) {
    %c0_i32 = arith.constant 0 : i32
    %c0_i32_0 = arith.constant 0 : i32
    %c0_i32_1 = arith.constant 0 : i32
    return %c0_i32, %c0_i32_0 : i32, i32
  }
  func.func @transform_5(%arg0: i32) -> (i32, i32) {
    %c0_i32 = arith.constant 0 : i32
    %c0_i32_0 = arith.constant 0 : i32
    return %arg0, %c0_i32 : i32, i32
  }
}

</mosaic_0001>

<llo_original>
// kernel: tpu_custom_call.1
$region0: #{tpu_custom_call.1}
  #allocation0 [shape = 'u32[]', space=smem, size = 0x4, offset = 0x4, fixed_abs, tag = 'smem constant byte address 0x4 - core index']
  #allocation1 [shape = 'u32[72,128]{1,0:T(1,128)}', space=vmem, size = 0x9000, scoped, tag = 'internal scratch']
  %s0 = inlined_call_operand.hbm [shape: f32[16,768], index: 0, kind: input, shape index: {}]
  %s1 = inlined_call_operand.hbm [shape: bf16[768,512], index: 1, kind: input, shape index: {}]
  %s2 = inlined_call_operand.hbm [shape: f32[1,512], index: 2, kind: input, shape index: {}]
  %s3 = inlined_call_operand.hbm [shape: bf16[512,128], index: 3, kind: input, shape index: {}]
  %s4 = inlined_call_operand.vmem [shape: f32[1,128], index: 4, kind: input, shape index: {}]
  %s5 = inlined_call_operand.vmem [shape: f32[16,8], index: 5, kind: output, shape index: {}]
  %s6 = sld [smem:[#allocation0]]
  $region46: #{tpu_custom_call.1} parent=0
    _
  %s8 = ssub.s32 1, %s6
  %s9 = scalar_select 0, %s8, %s6
  $region1: #{tpu_custom_call.1} parent=0
    #allocation2 [shape = 'u8[49152]{0}', space=vmem, size = 0xc000, scoped, tag = 'input window, operand 0, single buffered']
    #allocation3 [shape = 's32[1]{0}', space=sflag, size = 0x4, scoped, tag = 'scoped memory for tpu_custom_call.1']
    #allocation4 [shape = 'u8[786432]{0}', space=vmem, size = 0xc0000, scoped, tag = 'input window, operand 1, single buffered']
    #allocation5 [shape = 's32[1]{0}', space=sflag, size = 0x4, scoped, tag = 'scoped memory for tpu_custom_call.1']
    #allocation6 [shape = 'u8[2048]{0}', space=vmem, size = 0x800, scoped, tag = 'input window, operand 2, single buffered']
    #allocation7 [shape = 'u8[131072]{0}', space=vmem, size = 0x20000, scoped, tag = 'input window, operand 3, single buffered']
    #allocation8 [shape = 's32[1]{0}', space=sflag, size = 0x4, scoped, tag = 'scoped memory for tpu_custom_call.1']
    %10 = vsyncpa [#allocation3], 0
    %11 = vsyncpa [#allocation5], 0
    %12 = vsyncpa [#allocation8], 0
    // Predicated region
    $region2: #{tpu_custom_call.1} parent=1 // pred_check
      _
    $region3: #{tpu_custom_call.1} parent=1 // pred_check_branch
      %14 = sbr.rel (0) target = $region5
    $region4: #{tpu_custom_call.1} parent=1 // pred_region
      %16 = vsyncadd [#allocation3], 0
      %s17 = sshll.u32 %s0, 4
      %s18 = int_to_ptr.hbm [resolvable:$true] %s17
      %s19 = sshll.u32 [#allocation2], 4
      %s20 = int_to_ptr.vmem [resolvable:$true] %s19
      %25 = dma.hbm_to_vmem [thread:$0]  %s18, 1536, %s20, [#allocation3], 768, 768, 48
    $region5: #{tpu_custom_call.1} parent=1 // pred_fallthru
      _
    // Predicated region
    $region6: #{tpu_custom_call.1} parent=1 // pred_check
      _
    $region7: #{tpu_custom_call.1} parent=1 // pred_check_branch
      %27 = sbr.rel (0) target = $region9
    $region8: #{tpu_custom_call.1} parent=1 // pred_region
      %29 = vsyncadd [#allocation5], 0
      %s30 = sshll.u32 %s1, 4
      %s31 = int_to_ptr.hbm [resolvable:$true] %s30
      %s32 = sshll.u32 [#allocation4], 4
      %s33 = int_to_ptr.vmem [resolvable:$true] %s32
      %38 = dma.hbm_to_vmem [thread:$0]  %s31, 24576, %s33, [#allocation5], 256, 256, 16
    $region9: #{tpu_custom_call.1} parent=1 // pred_fallthru
      _
    // Predicated region
    $region10: #{tpu_custom_call.1} parent=1 // pred_check
      _
    $region11: #{tpu_custom_call.1} parent=1 // pred_check_branch
      %40 = sbr.rel (0) target = $region13
    $region12: #{tpu_custom_call.1} parent=1 // pred_region
      %42 = vsyncadd [#allocation5], 0
      %s44 = sshll.u32 %s2, 4
      %s45 = int_to_ptr.hbm [resolvable:$true] %s44
      %s46 = sshll.u32 [#allocation6], 4
      %s47 = int_to_ptr.vmem [resolvable:$true] %s46
      %49 = dma.hbm_to_vmem [thread:$0]  %s45, 64, %s47, [#allocation5]
    $region13: #{tpu_custom_call.1} parent=1 // pred_fallthru
      _
    // Predicated region
    $region14: #{tpu_custom_call.1} parent=1 // pred_check
      _
    $region15: #{tpu_custom_call.1} parent=1 // pred_check_branch
      %51 = sbr.rel (0) target = $region17
    $region16: #{tpu_custom_call.1} parent=1 // pred_region
      %53 = vsyncadd [#allocation8], 0
      %s54 = sshll.u32 %s3, 4
      %s55 = int_to_ptr.hbm [resolvable:$true] %s54
      %s56 = sshll.u32 [#allocation7], 4
      %s57 = int_to_ptr.vmem [resolvable:$true] %s56
      %62 = dma.hbm_to_vmem [thread:$0]  %s55, 4096, %s57, [#allocation8], 64, 64, 4
    $region17: #{tpu_custom_call.1} parent=1 // pred_fallthru
      _
    // Predicated region
    $region18: #{tpu_custom_call.1} parent=1 // pred_check
      _
    $region19: #{tpu_custom_call.1} parent=1 // pred_check_branch
      %64 = sbr.rel (0) target = $region21
    $region20: #{tpu_custom_call.1} parent=1 // pred_region
      _
    $region21: #{tpu_custom_call.1} parent=1 // pred_fallthru
      _
    // Predicated region
    $region22: #{tpu_custom_call.1} parent=1 // pred_check
      _
    $region23: #{tpu_custom_call.1} parent=1 // pred_check_branch
      %66 = sbr.rel (0) target = $region25
    $region24: #{tpu_custom_call.1} parent=1 // pred_region
      %68 = dma.done [#allocation3], 1536
    $region25: #{tpu_custom_call.1} parent=1 // pred_fallthru
      _
    // Predicated region
    $region26: #{tpu_custom_call.1} parent=1 // pred_check
      _
    $region27: #{tpu_custom_call.1} parent=1 // pred_check_branch
      %70 = sbr.rel (0) target = $region29
    $region28: #{tpu_custom_call.1} parent=1 // pred_region
      %72 = dma.done [#allocation5], 24576
    $region29: #{tpu_custom_call.1} parent=1 // pred_fallthru
      _
    // Predicated region
    $region30: #{tpu_custom_call.1} parent=1 // pred_check
      _
    $region31: #{tpu_custom_call.1} parent=1 // pred_check_branch
      %74 = sbr.rel (0) target = $region33
    $region32: #{tpu_custom_call.1} parent=1 // pred_region
      %76 = dma.done [#allocation5], 64
    $region33: #{tpu_custom_call.1} parent=1 // pred_fallthru
      _
    // Predicated region
    $region34: #{tpu_custom_call.1} parent=1 // pred_check
      _
    $region35: #{tpu_custom_call.1} parent=1 // pred_check_branch
      %78 = sbr.rel (0) target = $region37
    $region36: #{tpu_custom_call.1} parent=1 // pred_region
      %80 = dma.done [#allocation8], 4096
    $region37: #{tpu_custom_call.1} parent=1 // pred_fallthru
      _
    %v81 = vld [vmem:[#allocation2] sm:$0xff]
    %v82 = vld [vmem:[#allocation2 + $0x8] sm:$0xff]
    %v83 = vld [vmem:[#allocation2 + $0x10] sm:$0xff]
    %v84 = vld [vmem:[#allocation2 + $0x18] sm:$0xff]
    %v85 = vld [vmem:[#allocation2 + $0x20] sm:$0xff]
    %v86 = vld [vmem:[#allocation2 + $0x28] sm:$0xff]
    %v87 = vld [vmem:[#allocation2 + $0x30] sm:$0xff]
    %v88 = vld [vmem:[#allocation2 + $0x38] sm:$0xff]
    %v89 = vld [vmem:[#allocation2 + $0x40] sm:$0xff]
    %v90 = vld [vmem:[#allocation2 + $0x48] sm:$0xff]
    %v91 = vld [vmem:[#allocation2 + $0x50] sm:$0xff]
    %v92 = vld [vmem:[#allocation2 + $0x58] sm:$0xff]
    %v93 = vpack.c.bf16 %v87, %v81
    %v94 = vpack.c.bf16 %v88, %v82
    %v95 = vpack.c.bf16 %v89, %v83
    %v96 = vpack.c.bf16 %v90, %v84
    %v97 = vpack.c.bf16 %v91, %v85
    %v98 = vpack.c.bf16 %v92, %v86
    %v99 = vld [vmem:[#allocation4] sm:$0xff]
    %v100 = vld [vmem:[#allocation4 + $0x8] sm:$0xff]
    %v101 = vld [vmem:[#allocation4 + $0x10] sm:$0xff]
    %v102 = vld [vmem:[#allocation4 + $0x18] sm:$0xff]
    %v103 = vld [vmem:[#allocation4 + $0x20] sm:$0xff]
    %v104 = vld [vmem:[#allocation4 + $0x28] sm:$0xff]
    %v105 = vld [vmem:[#allocation4 + $0x30] sm:$0xff]
    %v106 = vld [vmem:[#allocation4 + $0x38] sm:$0xff]
    %v107 = vld [vmem:[#allocation4 + $0x40] sm:$0xff]
    %v108 = vld [vmem:[#allocation4 + $0x48] sm:$0xff]
    %v109 = vld [vmem:[#allocation4 + $0x50] sm:$0xff]
    %v110 = vld [vmem:[#allocation4 + $0x58] sm:$0xff]
    %v111 = vld [vmem:[#allocation4 + $0x60] sm:$0xff]
    %v112 = vld [vmem:[#allocation4 + $0x68] sm:$0xff]
    %v113 = vld [vmem:[#allocation4 + $0x70] sm:$0xff]
    %v114 = vld [vmem:[#allocation4 + $0x78] sm:$0xff]
    %v115 = vld [vmem:[#allocation4 + $0x80] sm:$0xff]
    %v116 = vld [vmem:[#allocation4 + $0x88] sm:$0xff]
    %v117 = vld [vmem:[#allocation4 + $0x90] sm:$0xff]
    %v118 = vld [vmem:[#allocation4 + $0x98] sm:$0xff]
    %v119 = vld [vmem:[#allocation4 + $0xa0] sm:$0xff]
    %v120 = vld [vmem:[#allocation4 + $0xa8] sm:$0xff]
    %v121 = vld [vmem:[#allocation4 + $0xb0] sm:$0xff]
    %v122 = vld [vmem:[#allocation4 + $0xb8] sm:$0xff]
    %v123 = vld [vmem:[#allocation4 + $0xc0] sm:$0xff]
    %v124 = vld [vmem:[#allocation4 + $0xc8] sm:$0xff]
    %v125 = vld [vmem:[#allocation4 + $0xd0] sm:$0xff]
    %v126 = vld [vmem:[#allocation4 + $0xd8] sm:$0xff]
    %v127 = vld [vmem:[#allocation4 + $0xe0] sm:$0xff]
    %v128 = vld [vmem:[#allocation4 + $0xe8] sm:$0xff]
    %v129 = vld [vmem:[#allocation4 + $0xf0] sm:$0xff]
    %v130 = vld [vmem:[#allocation4 + $0xf8] sm:$0xff]
    %v131 = vld [vmem:[#allocation4 + $0x100] sm:$0xff]
    %v132 = vld [vmem:[#allocation4 + $0x108] sm:$0xff]
    %v133 = vld [vmem:[#allocation4 + $0x110] sm:$0xff]
    %v134 = vld [vmem:[#allocation4 + $0x118] sm:$0xff]
    %v135 = vld [vmem:[#allocation4 + $0x120] sm:$0xff]
    %v136 = vld [vmem:[#allocation4 + $0x128] sm:$0xff]
    %v137 = vld [vmem:[#allocation4 + $0x130] sm:$0xff]
    %v138 = vld [vmem:[#allocation4 + $0x138] sm:$0xff]
    %v139 = vld [vmem:[#allocation4 + $0x140] sm:$0xff]
    %v140 = vld [vmem:[#allocation4 + $0x148] sm:$0xff]
    %v141 = vld [vmem:[#allocation4 + $0x150] sm:$0xff]
    %v142 = vld [vmem:[#allocation4 + $0x158] sm:$0xff]
    %v143 = vld [vmem:[#allocation4 + $0x160] sm:$0xff]
    %v144 = vld [vmem:[#allocation4 + $0x168] sm:$0xff]
    %v145 = vld [vmem:[#allocation4 + $0x170] sm:$0xff]
    %v146 = vld [vmem:[#allocation4 + $0x178] sm:$0xff]
    %v147 = vld [vmem:[#allocation4 + $0x180] sm:$0xff]
    %v148 = vld [vmem:[#allocation4 + $0x188] sm:$0xff]
    %v149 = vld [vmem:[#allocation4 + $0x190] sm:$0xff]
    %v150 = vld [vmem:[#allocation4 + $0x198] sm:$0xff]
    %v151 = vld [vmem:[#allocation4 + $0x1a0] sm:$0xff]
    %v152 = vld [vmem:[#allocation4 + $0x1a8] sm:$0xff]
    %v153 = vld [vmem:[#allocation4 + $0x1b0] sm:$0xff]
    %v154 = vld [vmem:[#allocation4 + $0x1b8] sm:$0xff]
    %v155 = vld [vmem:[#allocation4 + $0x1c0] sm:$0xff]
    %v156 = vld [vmem:[#allocation4 + $0x1c8] sm:$0xff]
    %v157 = vld [vmem:[#allocation4 + $0x1d0] sm:$0xff]
    %v158 = vld [vmem:[#allocation4 + $0x1d8] sm:$0xff]
    %v159 = vld [vmem:[#allocation4 + $0x1e0] sm:$0xff]
    %v160 = vld [vmem:[#allocation4 + $0x1e8] sm:$0xff]
    %v161 = vld [vmem:[#allocation4 + $0x1f0] sm:$0xff]
    %v162 = vld [vmem:[#allocation4 + $0x1f8] sm:$0xff]
    %v163 = vld [vmem:[#allocation4 + $0x200] sm:$0xff]
    %v164 = vld [vmem:[#allocation4 + $0x208] sm:$0xff]
    %v165 = vld [vmem:[#allocation4 + $0x210] sm:$0xff]
    %v166 = vld [vmem:[#allocation4 + $0x218] sm:$0xff]
    %v167 = vld [vmem:[#allocation4 + $0x220] sm:$0xff]
    %v168 = vld [vmem:[#allocation4 + $0x228] sm:$0xff]
    %v169 = vld [vmem:[#allocation4 + $0x230] sm:$0xff]
    %v170 = vld [vmem:[#allocation4 + $0x238] sm:$0xff]
    %v171 = vld [vmem:[#allocation4 + $0x240] sm:$0xff]
    %v172 = vld [vmem:[#allocation4 + $0x248] sm:$0xff]
    %v173 = vld [vmem:[#allocation4 + $0x250] sm:$0xff]
    %v174 = vld [vmem:[#allocation4 + $0x258] sm:$0xff]
    %v175 = vld [vmem:[#allocation4 + $0x260] sm:$0xff]
    %v176 = vld [vmem:[#allocation4 + $0x268] sm:$0xff]
    %v177 = vld [vmem:[#allocation4 + $0x270] sm:$0xff]
    %v178 = vld [vmem:[#allocation4 + $0x278] sm:$0xff]
    %v179 = vld [vmem:[#allocation4 + $0x280] sm:$0xff]
    %v180 = vld [vmem:[#allocation4 + $0x288] sm:$0xff]
    %v181 = vld [vmem:[#allocation4 + $0x290] sm:$0xff]
    %v182 = vld [vmem:[#allocation4 + $0x298] sm:$0xff]
    %v183 = vld [vmem:[#allocation4 + $0x2a0] sm:$0xff]
    %v184 = vld [vmem:[#allocation4 + $0x2a8] sm:$0xff]
    %v185 = vld [vmem:[#allocation4 + $0x2b0] sm:$0xff]
    %v186 = vld [vmem:[#allocation4 + $0x2b8] sm:$0xff]
    %v187 = vld [vmem:[#allocation4 + $0x2c0] sm:$0xff]
    %v188 = vld [vmem:[#allocation4 + $0x2c8] sm:$0xff]
    %v189 = vld [vmem:[#allocation4 + $0x2d0] sm:$0xff]
    %v190 = vld [vmem:[#allocation4 + $0x2d8] sm:$0xff]
    %v191 = vld [vmem:[#allocation4 + $0x2e0] sm:$0xff]
    %v192 = vld [vmem:[#allocation4 + $0x2e8] sm:$0xff]
    %v193 = vld [vmem:[#allocation4 + $0x2f0] sm:$0xff]
    %v194 = vld [vmem:[#allocation4 + $0x2f8] sm:$0xff]
    %v195 = vld [vmem:[#allocation4 + $0x300] sm:$0xff]
    %v196 = vld [vmem:[#allocation4 + $0x308] sm:$0xff]
    %v197 = vld [vmem:[#allocation4 + $0x310] sm:$0xff]
    %v198 = vld [vmem:[#allocation4 + $0x318] sm:$0xff]
    %v199 = vld [vmem:[#allocation4 + $0x320] sm:$0xff]
    %v200 = vld [vmem:[#allocation4 + $0x328] sm:$0xff]
    %v201 = vld [vmem:[#allocation4 + $0x330] sm:$0xff]
    %v202 = vld [vmem:[#allocation4 + $0x338] sm:$0xff]
    %v203 = vld [vmem:[#allocation4 + $0x340] sm:$0xff]
    %v204 = vld [vmem:[#allocation4 + $0x348] sm:$0xff]
    %v205 = vld [vmem:[#allocation4 + $0x350] sm:$0xff]
    %v206 = vld [vmem:[#allocation4 + $0x358] sm:$0xff]
    %v207 = vld [vmem:[#allocation4 + $0x360] sm:$0xff]
    %v208 = vld [vmem:[#allocation4 + $0x368] sm:$0xff]
    %v209 = vld [vmem:[#allocation4 + $0x370] sm:$0xff]
    %v210 = vld [vmem:[#allocation4 + $0x378] sm:$0xff]
    %v211 = vld [vmem:[#allocation4 + $0x380] sm:$0xff]
    %v212 = vld [vmem:[#allocation4 + $0x388] sm:$0xff]
    %v213 = vld [vmem:[#allocation4 + $0x390] sm:$0xff]
    %v214 = vld [vmem:[#allocation4 + $0x398] sm:$0xff]
    %v215 = vld [vmem:[#allocation4 + $0x3a0] sm:$0xff]
    %v216 = vld [vmem:[#allocation4 + $0x3a8] sm:$0xff]
    %v217 = vld [vmem:[#allocation4 + $0x3b0] sm:$0xff]
    %v218 = vld [vmem:[#allocation4 + $0x3b8] sm:$0xff]
    %v219 = vld [vmem:[#allocation4 + $0x3c0] sm:$0xff]
    %v220 = vld [vmem:[#allocation4 + $0x3c8] sm:$0xff]
    %v221 = vld [vmem:[#allocation4 + $0x3d0] sm:$0xff]
    %v222 = vld [vmem:[#allocation4 + $0x3d8] sm:$0xff]
    %v223 = vld [vmem:[#allocation4 + $0x3e0] sm:$0xff]
    %v224 = vld [vmem:[#allocation4 + $0x3e8] sm:$0xff]
    %v225 = vld [vmem:[#allocation4 + $0x3f0] sm:$0xff]
    %v226 = vld [vmem:[#allocation4 + $0x3f8] sm:$0xff]
    %v227 = vld [vmem:[#allocation4 + $0x400] sm:$0xff]
    %v228 = vld [vmem:[#allocation4 + $0x408] sm:$0xff]
    %v229 = vld [vmem:[#allocation4 + $0x410] sm:$0xff]
    %v230 = vld [vmem:[#allocation4 + $0x418] sm:$0xff]
    %v231 = vld [vmem:[#allocation4 + $0x420] sm:$0xff]
    %v232 = vld [vmem:[#allocation4 + $0x428] sm:$0xff]
    %v233 = vld [vmem:[#allocation4 + $0x430] sm:$0xff]
    %v234 = vld [vmem:[#allocation4 + $0x438] sm:$0xff]
    %v235 = vld [vmem:[#allocation4 + $0x440] sm:$0xff]
    %v236 = vld [vmem:[#allocation4 + $0x448] sm:$0xff]
    %v237 = vld [vmem:[#allocation4 + $0x450] sm:$0xff]
    %v238 = vld [vmem:[#allocation4 + $0x458] sm:$0xff]
    %v239 = vld [vmem:[#allocation4 + $0x460] sm:$0xff]
    %v240 = vld [vmem:[#allocation4 + $0x468] sm:$0xff]
    %v241 = vld [vmem:[#allocation4 + $0x470] sm:$0xff]
    %v242 = vld [vmem:[#allocation4 + $0x478] sm:$0xff]
    %v243 = vld [vmem:[#allocation4 + $0x480] sm:$0xff]
    %v244 = vld [vmem:[#allocation4 + $0x488] sm:$0xff]
    %v245 = vld [vmem:[#allocation4 + $0x490] sm:$0xff]
    %v246 = vld [vmem:[#allocation4 + $0x498] sm:$0xff]
    %v247 = vld [vmem:[#allocation4 + $0x4a0] sm:$0xff]
    %v248 = vld [vmem:[#allocation4 + $0x4a8] sm:$0xff]
    %v249 = vld [vmem:[#allocation4 + $0x4b0] sm:$0xff]
    %v250 = vld [vmem:[#allocation4 + $0x4b8] sm:$0xff]
    %v251 = vld [vmem:[#allocation4 + $0x4c0] sm:$0xff]
    %v252 = vld [vmem:[#allocation4 + $0x4c8] sm:$0xff]
    %v253 = vld [vmem:[#allocation4 + $0x4d0] sm:$0xff]
    %v254 = vld [vmem:[#allocation4 + $0x4d8] sm:$0xff]
    %v255 = vld [vmem:[#allocation4 + $0x4e0] sm:$0xff]
    %v256 = vld [vmem:[#allocation4 + $0x4e8] sm:$0xff]
    %v257 = vld [vmem:[#allocation4 + $0x4f0] sm:$0xff]
    %v258 = vld [vmem:[#allocation4 + $0x4f8] sm:$0xff]
    %v259 = vld [vmem:[#allocation4 + $0x500] sm:$0xff]
    %v260 = vld [vmem:[#allocation4 + $0x508] sm:$0xff]
    %v261 = vld [vmem:[#allocation4 + $0x510] sm:$0xff]
    %v262 = vld [vmem:[#allocation4 + $0x518] sm:$0xff]
    %v263 = vld [vmem:[#allocation4 + $0x520] sm:$0xff]
    %v264 = vld [vmem:[#allocation4 + $0x528] sm:$0xff]
    %v265 = vld [vmem:[#allocation4 + $0x530] sm:$0xff]
    %v266 = vld [vmem:[#allocation4 + $0x538] sm:$0xff]
    %v267 = vld [vmem:[#allocation4 + $0x540] sm:$0xff]
    %v268 = vld [vmem:[#allocation4 + $0x548] sm:$0xff]
    %v269 = vld [vmem:[#allocation4 + $0x550] sm:$0xff]
    %v270 = vld [vmem:[#allocation4 + $0x558] sm:$0xff]
    %v271 = vld [vmem:[#allocation4 + $0x560] sm:$0xff]
    %v272 = vld [vmem:[#allocation4 + $0x568] sm:$0xff]
    %v273 = vld [vmem:[#allocation4 + $0x570] sm:$0xff]
    %v274 = vld [vmem:[#allocation4 + $0x578] sm:$0xff]
    %v275 = vld [vmem:[#allocation4 + $0x580] sm:$0xff]
    %v276 = vld [vmem:[#allocation4 + $0x588] sm:$0xff]
    %v277 = vld [vmem:[#allocation4 + $0x590] sm:$0xff]
    %v278 = vld [vmem:[#allocation4 + $0x598] sm:$0xff]
    %v279 = vld [vmem:[#allocation4 + $0x5a0] sm:$0xff]
    %v280 = vld [vmem:[#allocation4 + $0x5a8] sm:$0xff]
    %v281 = vld [vmem:[#allocation4 + $0x5b0] sm:$0xff]
    %v282 = vld [vmem:[#allocation4 + $0x5b8] sm:$0xff]
    %v283 = vld [vmem:[#allocation4 + $0x5c0] sm:$0xff]
    %v284 = vld [vmem:[#allocation4 + $0x5c8] sm:$0xff]
    %v285 = vld [vmem:[#allocation4 + $0x5d0] sm:$0xff]
    %v286 = vld [vmem:[#allocation4 + $0x5d8] sm:$0xff]
    %v287 = vld [vmem:[#allocation4 + $0x5e0] sm:$0xff]
    %v288 = vld [vmem:[#allocation4 + $0x5e8] sm:$0xff]
    %v289 = vld [vmem:[#allocation4 + $0x5f0] sm:$0xff]
    %v290 = vld [vmem:[#allocation4 + $0x5f8] sm:$0xff]
    %v291 = vld [vmem:[#allocation6] sm:$0xf]
    %v293 = vperm.slane %v291, 0
    %v294 = vperm.slane %v291, 1
    %v295 = vperm.slane %v291, 2
    %v296 = vperm.slane %v291, 3
    %v493 = vunpack.c.l.b16 %v99
    %v494 = vunpack.c.h.b16 %v99
    %v495 = vunpack.c.l.b16 %v100
    %v496 = vunpack.c.h.b16 %v100
    %v497 = vunpack.c.l.b16 %v101
    %v498 = vunpack.c.h.b16 %v101
    %v499 = vunpack.c.l.b16 %v102
    %v500 = vunpack.c.h.b16 %v102
    %v501 = vunpack.c.l.b16 %v103
    %v502 = vunpack.c.h.b16 %v103
    %v503 = vunpack.c.l.b16 %v104
    %v504 = vunpack.c.h.b16 %v104
    %v505 = vunpack.c.l.b16 %v105
    %v506 = vunpack.c.h.b16 %v105
    %v507 = vunpack.c.l.b16 %v106
    %v508 = vunpack.c.h.b16 %v106
    %v509 = vunpack.c.l.b16 %v107
    %v510 = vunpack.c.h.b16 %v107
    %v511 = vunpack.c.l.b16 %v108
    %v512 = vunpack.c.h.b16 %v108
    %v513 = vunpack.c.l.b16 %v109
    %v514 = vunpack.c.h.b16 %v109
    %v515 = vunpack.c.l.b16 %v110
    %v516 = vunpack.c.h.b16 %v110
    %v517 = vunpack.c.l.b16 %v111
    %v518 = vunpack.c.h.b16 %v111
    %v519 = vunpack.c.l.b16 %v112
    %v520 = vunpack.c.h.b16 %v112
    %v521 = vunpack.c.l.b16 %v113
    %v522 = vunpack.c.h.b16 %v113
    %v523 = vunpack.c.l.b16 %v114
    %v524 = vunpack.c.h.b16 %v114
    %v525 = vunpack.c.l.b16 %v115
    %v526 = vunpack.c.h.b16 %v115
    %v527 = vunpack.c.l.b16 %v116
    %v528 = vunpack.c.h.b16 %v116
    %v529 = vunpack.c.l.b16 %v117
    %v530 = vunpack.c.h.b16 %v117
    %v531 = vunpack.c.l.b16 %v118
    %v532 = vunpack.c.h.b16 %v118
    %v533 = vunpack.c.l.b16 %v119
    %v534 = vunpack.c.h.b16 %v119
    %v535 = vunpack.c.l.b16 %v120
    %v536 = vunpack.c.h.b16 %v120
    %v537 = vunpack.c.l.b16 %v121
    %v538 = vunpack.c.h.b16 %v121
    %v539 = vunpack.c.l.b16 %v122
    %v540 = vunpack.c.h.b16 %v122
    %v541 = vunpack.c.l.b16 %v123
    %v542 = vunpack.c.h.b16 %v123
    %v543 = vunpack.c.l.b16 %v124
    %v544 = vunpack.c.h.b16 %v124
    %v545 = vunpack.c.l.b16 %v125
    %v546 = vunpack.c.h.b16 %v125
    %v547 = vunpack.c.l.b16 %v126
    %v548 = vunpack.c.h.b16 %v126
    %v549 = vunpack.c.l.b16 %v127
    %v550 = vunpack.c.h.b16 %v127
    %v551 = vunpack.c.l.b16 %v128
    %v552 = vunpack.c.h.b16 %v128
    %v553 = vunpack.c.l.b16 %v129
    %v554 = vunpack.c.h.b16 %v129
    %v555 = vunpack.c.l.b16 %v130
    %v556 = vunpack.c.h.b16 %v130
    %v557 = vunpack.c.l.b16 %v131
    %v558 = vunpack.c.h.b16 %v131
    %v559 = vunpack.c.l.b16 %v132
    %v560 = vunpack.c.h.b16 %v132
    %v561 = vunpack.c.l.b16 %v133
    %v562 = vunpack.c.h.b16 %v133
    %v563 = vunpack.c.l.b16 %v134
    %v564 = vunpack.c.h.b16 %v134
    %v565 = vunpack.c.l.b16 %v135
    %v566 = vunpack.c.h.b16 %v135
    %v567 = vunpack.c.l.b16 %v136
    %v568 = vunpack.c.h.b16 %v136
    %v569 = vunpack.c.l.b16 %v137
    %v570 = vunpack.c.h.b16 %v137
    %v571 = vunpack.c.l.b16 %v138
    %v572 = vunpack.c.h.b16 %v138
    %v573 = vunpack.c.l.b16 %v139
    %v574 = vunpack.c.h.b16 %v139
    %v575 = vunpack.c.l.b16 %v140
    %v576 = vunpack.c.h.b16 %v140
    %v577 = vunpack.c.l.b16 %v141
    %v578 = vunpack.c.h.b16 %v141
    %v579 = vunpack.c.l.b16 %v142
    %v580 = vunpack.c.h.b16 %v142
    %v581 = vunpack.c.l.b16 %v143
    %v582 = vunpack.c.h.b16 %v143
    %v583 = vunpack.c.l.b16 %v144
    %v584 = vunpack.c.h.b16 %v144
    %v585 = vunpack.c.l.b16 %v145
    %v586 = vunpack.c.h.b16 %v145
    %v587 = vunpack.c.l.b16 %v146
    %v588 = vunpack.c.h.b16 %v146
    %v589 = vunpack.c.l.b16 %v147
    %v590 = vunpack.c.h.b16 %v147
    %v591 = vunpack.c.l.b16 %v148
    %v592 = vunpack.c.h.b16 %v148
    %v593 = vunpack.c.l.b16 %v149
    %v594 = vunpack.c.h.b16 %v149
    %v595 = vunpack.c.l.b16 %v150
    %v596 = vunpack.c.h.b16 %v150
    %v597 = vunpack.c.l.b16 %v151
    %v598 = vunpack.c.h.b16 %v151
    %v599 = vunpack.c.l.b16 %v152
    %v600 = vunpack.c.h.b16 %v152
    %v601 = vunpack.c.l.b16 %v153
    %v602 = vunpack.c.h.b16 %v153
    %v603 = vunpack.c.l.b16 %v154
    %v604 = vunpack.c.h.b16 %v154
    %v605 = vunpack.c.l.b16 %v155
    %v606 = vunpack.c.h.b16 %v155
    %v607 = vunpack.c.l.b16 %v156
    %v608 = vunpack.c.h.b16 %v156
    %v609 = vunpack.c.l.b16 %v157
    %v610 = vunpack.c.h.b16 %v157
    %v611 = vunpack.c.l.b16 %v158
    %v612 = vunpack.c.h.b16 %v158
    %v613 = vunpack.c.l.b16 %v159
    %v614 = vunpack.c.h.b16 %v159
    %v615 = vunpack.c.l.b16 %v160
    %v616 = vunpack.c.h.b16 %v160
    %v617 = vunpack.c.l.b16 %v161
    %v618 = vunpack.c.h.b16 %v161
    %v619 = vunpack.c.l.b16 %v162
    %v620 = vunpack.c.h.b16 %v162
    %v621 = vunpack.c.l.b16 %v163
    %v622 = vunpack.c.h.b16 %v163
    %v623 = vunpack.c.l.b16 %v164
    %v624 = vunpack.c.h.b16 %v164
    %v625 = vunpack.c.l.b16 %v165
    %v626 = vunpack.c.h.b16 %v165
    %v627 = vunpack.c.l.b16 %v166
    %v628 = vunpack.c.h.b16 %v166
    %v629 = vunpack.c.l.b16 %v167
    %v630 = vunpack.c.h.b16 %v167
    %v631 = vunpack.c.l.b16 %v168
    %v632 = vunpack.c.h.b16 %v168
    %v633 = vunpack.c.l.b16 %v169
    %v634 = vunpack.c.h.b16 %v169
    %v635 = vunpack.c.l.b16 %v170
    %v636 = vunpack.c.h.b16 %v170
    %v637 = vunpack.c.l.b16 %v171
    %v638 = vunpack.c.h.b16 %v171
    %v639 = vunpack.c.l.b16 %v172
    %v640 = vunpack.c.h.b16 %v172
    %v641 = vunpack.c.l.b16 %v173
    %v642 = vunpack.c.h.b16 %v173
    %v643 = vunpack.c.l.b16 %v174
    %v644 = vunpack.c.h.b16 %v174
    %v645 = vunpack.c.l.b16 %v175
    %v646 = vunpack.c.h.b16 %v175
    %v647 = vunpack.c.l.b16 %v176
    %v648 = vunpack.c.h.b16 %v176
    %v649 = vunpack.c.l.b16 %v177
    %v650 = vunpack.c.h.b16 %v177
    %v651 = vunpack.c.l.b16 %v178
    %v652 = vunpack.c.h.b16 %v178
    %v653 = vunpack.c.l.b16 %v179
    %v654 = vunpack.c.h.b16 %v179
    %v655 = vunpack.c.l.b16 %v180
    %v656 = vunpack.c.h.b16 %v180
    %v657 = vunpack.c.l.b16 %v181
    %v658 = vunpack.c.h.b16 %v181
    %v659 = vunpack.c.l.b16 %v182
    %v660 = vunpack.c.h.b16 %v182
    %v661 = vunpack.c.l.b16 %v183
    %v662 = vunpack.c.h.b16 %v183
    %v663 = vunpack.c.l.b16 %v184
    %v664 = vunpack.c.h.b16 %v184
    %v665 = vunpack.c.l.b16 %v185
    %v666 = vunpack.c.h.b16 %v185
    %v667 = vunpack.c.l.b16 %v186
    %v668 = vunpack.c.h.b16 %v186
    %v669 = vunpack.c.l.b16 %v187
    %v670 = vunpack.c.h.b16 %v187
    %v671 = vunpack.c.l.b16 %v188
    %v672 = vunpack.c.h.b16 %v188
    %v673 = vunpack.c.l.b16 %v189
    %v674 = vunpack.c.h.b16 %v189
    %v675 = vunpack.c.l.b16 %v190
    %v676 = vunpack.c.h.b16 %v190
    %v677 = vunpack.c.l.b16 %v191
    %v678 = vunpack.c.h.b16 %v191
    %v679 = vunpack.c.l.b16 %v192
    %v680 = vunpack.c.h.b16 %v192
    %v681 = vunpack.c.l.b16 %v193
    %v682 = vunpack.c.h.b16 %v193
    %v683 = vunpack.c.l.b16 %v194
    %v684 = vunpack.c.h.b16 %v194
    %v685 = vunpack.c.l.b16 %v195
    %v686 = vunpack.c.h.b16 %v195
    %v687 = vunpack.c.l.b16 %v196
    %v688 = vunpack.c.h.b16 %v196
    %v689 = vunpack.c.l.b16 %v197
    %v690 = vunpack.c.h.b16 %v197
    %v691 = vunpack.c.l.b16 %v198
    %v692 = vunpack.c.h.b16 %v198
    %v693 = vunpack.c.l.b16 %v199
    %v694 = vunpack.c.h.b16 %v199
    %v695 = vunpack.c.l.b16 %v200
    %v696 = vunpack.c.h.b16 %v200
    %v697 = vunpack.c.l.b16 %v201
    %v698 = vunpack.c.h.b16 %v201
    %v699 = vunpack.c.l.b16 %v202
    %v700 = vunpack.c.h.b16 %v202
    %v701 = vunpack.c.l.b16 %v203
    %v702 = vunpack.c.h.b16 %v203
    %v703 = vunpack.c.l.b16 %v204
    %v704 = vunpack.c.h.b16 %v204
    %v705 = vunpack.c.l.b16 %v205
    %v706 = vunpack.c.h.b16 %v205
    %v707 = vunpack.c.l.b16 %v206
    %v708 = vunpack.c.h.b16 %v206
    %v709 = vunpack.c.l.b16 %v207
    %v710 = vunpack.c.h.b16 %v207
    %v711 = vunpack.c.l.b16 %v208
    %v712 = vunpack.c.h.b16 %v208
    %v713 = vunpack.c.l.b16 %v209
    %v714 = vunpack.c.h.b16 %v209
    %v715 = vunpack.c.l.b16 %v210
    %v716 = vunpack.c.h.b16 %v210
    %v717 = vunpack.c.l.b16 %v211
    %v718 = vunpack.c.h.b16 %v211
    %v719 = vunpack.c.l.b16 %v212
    %v720 = vunpack.c.h.b16 %v212
    %v721 = vunpack.c.l.b16 %v213
    %v722 = vunpack.c.h.b16 %v213
    %v723 = vunpack.c.l.b16 %v214
    %v724 = vunpack.c.h.b16 %v214
    %v725 = vunpack.c.l.b16 %v215
    %v726 = vunpack.c.h.b16 %v215
    %v727 = vunpack.c.l.b16 %v216
    %v728 = vunpack.c.h.b16 %v216
    %v729 = vunpack.c.l.b16 %v217
    %v730 = vunpack.c.h.b16 %v217
    %v731 = vunpack.c.l.b16 %v218
    %v732 = vunpack.c.h.b16 %v218
    %v733 = vunpack.c.l.b16 %v219
    %v734 = vunpack.c.h.b16 %v219
    %v735 = vunpack.c.l.b16 %v220
    %v736 = vunpack.c.h.b16 %v220
    %v737 = vunpack.c.l.b16 %v221
    %v738 = vunpack.c.h.b16 %v221
    %v739 = vunpack.c.l.b16 %v222
    %v740 = vunpack.c.h.b16 %v222
    %v741 = vunpack.c.l.b16 %v223
    %v742 = vunpack.c.h.b16 %v223
    %v743 = vunpack.c.l.b16 %v224
    %v744 = vunpack.c.h.b16 %v224
    %v745 = vunpack.c.l.b16 %v225
    %v746 = vunpack.c.h.b16 %v225
    %v747 = vunpack.c.l.b16 %v226
    %v748 = vunpack.c.h.b16 %v226
    %v749 = vunpack.c.l.b16 %v227
    %v750 = vunpack.c.h.b16 %v227
    %v751 = vunpack.c.l.b16 %v228
    %v752 = vunpack.c.h.b16 %v228
    %v753 = vunpack.c.l.b16 %v229
    %v754 = vunpack.c.h.b16 %v229
    %v755 = vunpack.c.l.b16 %v230
    %v756 = vunpack.c.h.b16 %v230
    %v757 = vunpack.c.l.b16 %v231
    %v758 = vunpack.c.h.b16 %v231
    %v759 = vunpack.c.l.b16 %v232
    %v760 = vunpack.c.h.b16 %v232
    %v761 = vunpack.c.l.b16 %v233
    %v762 = vunpack.c.h.b16 %v233
    %v763 = vunpack.c.l.b16 %v234
    %v764 = vunpack.c.h.b16 %v234
    %v765 = vunpack.c.l.b16 %v235
    %v766 = vunpack.c.h.b16 %v235
    %v767 = vunpack.c.l.b16 %v236
    %v768 = vunpack.c.h.b16 %v236
    %v769 = vunpack.c.l.b16 %v237
    %v770 = vunpack.c.h.b16 %v237
    %v771 = vunpack.c.l.b16 %v238
    %v772 = vunpack.c.h.b16 %v238
    %v773 = vunpack.c.l.b16 %v239
    %v774 = vunpack.c.h.b16 %v239
    %v775 = vunpack.c.l.b16 %v240
    %v776 = vunpack.c.h.b16 %v240
    %v777 = vunpack.c.l.b16 %v241
    %v778 = vunpack.c.h.b16 %v241
    %v779 = vunpack.c.l.b16 %v242
    %v780 = vunpack.c.h.b16 %v242
    %v781 = vunpack.c.l.b16 %v243
    %v782 = vunpack.c.h.b16 %v243
    %v783 = vunpack.c.l.b16 %v244
    %v784 = vunpack.c.h.b16 %v244
    %v785 = vunpack.c.l.b16 %v245
    %v786 = vunpack.c.h.b16 %v245
    %v787 = vunpack.c.l.b16 %v246
    %v788 = vunpack.c.h.b16 %v246
    %v789 = vunpack.c.l.b16 %v247
    %v790 = vunpack.c.h.b16 %v247
    %v791 = vunpack.c.l.b16 %v248
    %v792 = vunpack.c.h.b16 %v248
    %v793 = vunpack.c.l.b16 %v249
    %v794 = vunpack.c.h.b16 %v249
    %v795 = vunpack.c.l.b16 %v250
    %v796 = vunpack.c.h.b16 %v250
    %v797 = vunpack.c.l.b16 %v251
    %v798 = vunpack.c.h.b16 %v251
    %v799 = vunpack.c.l.b16 %v252
    %v800 = vunpack.c.h.b16 %v252
    %v801 = vunpack.c.l.b16 %v253
    %v802 = vunpack.c.h.b16 %v253
    %v803 = vunpack.c.l.b16 %v254
    %v804 = vunpack.c.h.b16 %v254
    %v805 = vunpack.c.l.b16 %v255
    %v806 = vunpack.c.h.b16 %v255
    %v807 = vunpack.c.l.b16 %v256
    %v808 = vunpack.c.h.b16 %v256
    %v809 = vunpack.c.l.b16 %v257
    %v810 = vunpack.c.h.b16 %v257
    %v811 = vunpack.c.l.b16 %v258
    %v812 = vunpack.c.h.b16 %v258
    %v813 = vunpack.c.l.b16 %v259
    %v814 = vunpack.c.h.b16 %v259
    %v815 = vunpack.c.l.b16 %v260
    %v816 = vunpack.c.h.b16 %v260
    %v817 = vunpack.c.l.b16 %v261
    %v818 = vunpack.c.h.b16 %v261
    %v819 = vunpack.c.l.b16 %v262
    %v820 = vunpack.c.h.b16 %v262
    %v821 = vunpack.c.l.b16 %v263
    %v822 = vunpack.c.h.b16 %v263
    %v823 = vunpack.c.l.b16 %v264
    %v824 = vunpack.c.h.b16 %v264
    %v825 = vunpack.c.l.b16 %v265
    %v826 = vunpack.c.h.b16 %v265
    %v827 = vunpack.c.l.b16 %v266
    %v828 = vunpack.c.h.b16 %v266
    %v829 = vunpack.c.l.b16 %v267
    %v830 = vunpack.c.h.b16 %v267
    %v831 = vunpack.c.l.b16 %v268
    %v832 = vunpack.c.h.b16 %v268
    %v833 = vunpack.c.l.b16 %v269
    %v834 = vunpack.c.h.b16 %v269
    %v835 = vunpack.c.l.b16 %v270
    %v836 = vunpack.c.h.b16 %v270
    %v837 = vunpack.c.l.b16 %v271
    %v838 = vunpack.c.h.b16 %v271
    %v839 = vunpack.c.l.b16 %v272
    %v840 = vunpack.c.h.b16 %v272
    %v841 = vunpack.c.l.b16 %v273
    %v842 = vunpack.c.h.b16 %v273
    %v843 = vunpack.c.l.b16 %v274
    %v844 = vunpack.c.h.b16 %v274
    %v845 = vunpack.c.l.b16 %v275
    %v846 = vunpack.c.h.b16 %v275
    %v847 = vunpack.c.l.b16 %v276
    %v848 = vunpack.c.h.b16 %v276
    %v849 = vunpack.c.l.b16 %v277
    %v850 = vunpack.c.h.b16 %v277
    %v851 = vunpack.c.l.b16 %v278
    %v852 = vunpack.c.h.b16 %v278
    %v853 = vunpack.c.l.b16 %v279
    %v854 = vunpack.c.h.b16 %v279
    %v855 = vunpack.c.l.b16 %v280
    %v856 = vunpack.c.h.b16 %v280
    %v857 = vunpack.c.l.b16 %v281
    %v858 = vunpack.c.h.b16 %v281
    %v859 = vunpack.c.l.b16 %v282
    %v860 = vunpack.c.h.b16 %v282
    %v861 = vunpack.c.l.b16 %v283
    %v862 = vunpack.c.h.b16 %v283
    %v863 = vunpack.c.l.b16 %v284
    %v864 = vunpack.c.h.b16 %v284
    %v865 = vunpack.c.l.b16 %v285
    %v866 = vunpack.c.h.b16 %v285
    %v867 = vunpack.c.l.b16 %v286
    %v868 = vunpack.c.h.b16 %v286
    %v869 = vunpack.c.l.b16 %v287
    %v870 = vunpack.c.h.b16 %v287
    %v871 = vunpack.c.l.b16 %v288
    %v872 = vunpack.c.h.b16 %v288
    %v873 = vunpack.c.l.b16 %v289
    %v874 = vunpack.c.h.b16 %v289
    %v875 = vunpack.c.l.b16 %v290
    %v876 = vunpack.c.h.b16 %v290
    %v877 = vpack.c.b16 %v497, %v493
    %v878 = vpack.c.b16 %v498, %v494
    %v879 = vpack.c.b16 %v499, %v495
    %v880 = vpack.c.b16 %v500, %v496
    %v881 = vpack.c.b16 %v505, %v501
    %v882 = vpack.c.b16 %v506, %v502
    %v883 = vpack.c.b16 %v507, %v503
    %v884 = vpack.c.b16 %v508, %v504
    %v885 = vpack.c.b16 %v513, %v509
    %v886 = vpack.c.b16 %v514, %v510
    %v887 = vpack.c.b16 %v515, %v511
    %v888 = vpack.c.b16 %v516, %v512
    %v889 = vpack.c.b16 %v521, %v517
    %v890 = vpack.c.b16 %v522, %v518
    %v891 = vpack.c.b16 %v523, %v519
    %v892 = vpack.c.b16 %v524, %v520
    %v893 = vpack.c.b16 %v529, %v525
    %v894 = vpack.c.b16 %v530, %v526
    %v895 = vpack.c.b16 %v531, %v527
    %v896 = vpack.c.b16 %v532, %v528
    %v897 = vpack.c.b16 %v537, %v533
    %v898 = vpack.c.b16 %v538, %v534
    %v899 = vpack.c.b16 %v539, %v535
    %v900 = vpack.c.b16 %v540, %v536
    %v901 = vpack.c.b16 %v545, %v541
    %v902 = vpack.c.b16 %v546, %v542
    %v903 = vpack.c.b16 %v547, %v543
    %v904 = vpack.c.b16 %v548, %v544
    %v905 = vpack.c.b16 %v553, %v549
    %v906 = vpack.c.b16 %v554, %v550
    %v907 = vpack.c.b16 %v555, %v551
    %v908 = vpack.c.b16 %v556, %v552
    %v909 = vpack.c.b16 %v561, %v557
    %v910 = vpack.c.b16 %v562, %v558
    %v911 = vpack.c.b16 %v563, %v559
    %v912 = vpack.c.b16 %v564, %v560
    %v913 = vpack.c.b16 %v569, %v565
    %v914 = vpack.c.b16 %v570, %v566
    %v915 = vpack.c.b16 %v571, %v567
    %v916 = vpack.c.b16 %v572, %v568
    %v917 = vpack.c.b16 %v577, %v573
    %v918 = vpack.c.b16 %v578, %v574
    %v919 = vpack.c.b16 %v579, %v575
    %v920 = vpack.c.b16 %v580, %v576
    %v921 = vpack.c.b16 %v585, %v581
    %v922 = vpack.c.b16 %v586, %v582
    %v923 = vpack.c.b16 %v587, %v583
    %v924 = vpack.c.b16 %v588, %v584
    %v925 = vpack.c.b16 %v593, %v589
    %v926 = vpack.c.b16 %v594, %v590
    %v927 = vpack.c.b16 %v595, %v591
    %v928 = vpack.c.b16 %v596, %v592
    %v929 = vpack.c.b16 %v601, %v597
    %v930 = vpack.c.b16 %v602, %v598
    %v931 = vpack.c.b16 %v603, %v599
    %v932 = vpack.c.b16 %v604, %v600
    %v933 = vpack.c.b16 %v609, %v605
    %v934 = vpack.c.b16 %v610, %v606
    %v935 = vpack.c.b16 %v611, %v607
    %v936 = vpack.c.b16 %v612, %v608
    %v937 = vpack.c.b16 %v617, %v613
    %v938 = vpack.c.b16 %v618, %v614
    %v939 = vpack.c.b16 %v619, %v615
    %v940 = vpack.c.b16 %v620, %v616
    %v941 = vpack.c.b16 %v625, %v621
    %v942 = vpack.c.b16 %v626, %v622
    %v943 = vpack.c.b16 %v627, %v623
    %v944 = vpack.c.b16 %v628, %v624
    %v945 = vpack.c.b16 %v633, %v629
    %v946 = vpack.c.b16 %v634, %v630
    %v947 = vpack.c.b16 %v635, %v631
    %v948 = vpack.c.b16 %v636, %v632
    %v949 = vpack.c.b16 %v641, %v637
    %v950 = vpack.c.b16 %v642, %v638
    %v951 = vpack.c.b16 %v643, %v639
    %v952 = vpack.c.b16 %v644, %v640
    %v953 = vpack.c.b16 %v649, %v645
    %v954 = vpack.c.b16 %v650, %v646
    %v955 = vpack.c.b16 %v651, %v647
    %v956 = vpack.c.b16 %v652, %v648
    %v957 = vpack.c.b16 %v657, %v653
    %v958 = vpack.c.b16 %v658, %v654
    %v959 = vpack.c.b16 %v659, %v655
    %v960 = vpack.c.b16 %v660, %v656
    %v961 = vpack.c.b16 %v665, %v661
    %v962 = vpack.c.b16 %v666, %v662
    %v963 = vpack.c.b16 %v667, %v663
    %v964 = vpack.c.b16 %v668, %v664
    %v965 = vpack.c.b16 %v673, %v669
    %v966 = vpack.c.b16 %v674, %v670
    %v967 = vpack.c.b16 %v675, %v671
    %v968 = vpack.c.b16 %v676, %v672
    %v969 = vpack.c.b16 %v681, %v677
    %v970 = vpack.c.b16 %v682, %v678
    %v971 = vpack.c.b16 %v683, %v679
    %v972 = vpack.c.b16 %v684, %v680
    %v973 = vpack.c.b16 %v689, %v685
    %v974 = vpack.c.b16 %v690, %v686
    %v975 = vpack.c.b16 %v691, %v687
    %v976 = vpack.c.b16 %v692, %v688
    %v977 = vpack.c.b16 %v697, %v693
    %v978 = vpack.c.b16 %v698, %v694
    %v979 = vpack.c.b16 %v699, %v695
    %v980 = vpack.c.b16 %v700, %v696
    %v981 = vpack.c.b16 %v705, %v701
    %v982 = vpack.c.b16 %v706, %v702
    %v983 = vpack.c.b16 %v707, %v703
    %v984 = vpack.c.b16 %v708, %v704
    %v985 = vpack.c.b16 %v713, %v709
    %v986 = vpack.c.b16 %v714, %v710
    %v987 = vpack.c.b16 %v715, %v711
    %v988 = vpack.c.b16 %v716, %v712
    %v989 = vpack.c.b16 %v721, %v717
    %v990 = vpack.c.b16 %v722, %v718
    %v991 = vpack.c.b16 %v723, %v719
    %v992 = vpack.c.b16 %v724, %v720
    %v993 = vpack.c.b16 %v729, %v725
    %v994 = vpack.c.b16 %v730, %v726
    %v995 = vpack.c.b16 %v731, %v727
    %v996 = vpack.c.b16 %v732, %v728
    %v997 = vpack.c.b16 %v737, %v733
    %v998 = vpack.c.b16 %v738, %v734
    %v999 = vpack.c.b16 %v739, %v735
    %v1000 = vpack.c.b16 %v740, %v736
    %v1001 = vpack.c.b16 %v745, %v741
    %v1002 = vpack.c.b16 %v746, %v742
    %v1003 = vpack.c.b16 %v747, %v743
    %v1004 = vpack.c.b16 %v748, %v744
    %v1005 = vpack.c.b16 %v753, %v749
    %v1006 = vpack.c.b16 %v754, %v750
    %v1007 = vpack.c.b16 %v755, %v751
    %v1008 = vpack.c.b16 %v756, %v752
    %v1009 = vpack.c.b16 %v761, %v757
    %v1010 = vpack.c.b16 %v762, %v758
    %v1011 = vpack.c.b16 %v763, %v759
    %v1012 = vpack.c.b16 %v764, %v760
    %v1013 = vpack.c.b16 %v769, %v765
    %v1014 = vpack.c.b16 %v770, %v766
    %v1015 = vpack.c.b16 %v771, %v767
    %v1016 = vpack.c.b16 %v772, %v768
    %v1017 = vpack.c.b16 %v777, %v773
    %v1018 = vpack.c.b16 %v778, %v774
    %v1019 = vpack.c.b16 %v779, %v775
    %v1020 = vpack.c.b16 %v780, %v776
    %v1021 = vpack.c.b16 %v785, %v781
    %v1022 = vpack.c.b16 %v786, %v782
    %v1023 = vpack.c.b16 %v787, %v783
    %v1024 = vpack.c.b16 %v788, %v784
    %v1025 = vpack.c.b16 %v793, %v789
    %v1026 = vpack.c.b16 %v794, %v790
    %v1027 = vpack.c.b16 %v795, %v791
    %v1028 = vpack.c.b16 %v796, %v792
    %v1029 = vpack.c.b16 %v801, %v797
    %v1030 = vpack.c.b16 %v802, %v798
    %v1031 = vpack.c.b16 %v803, %v799
    %v1032 = vpack.c.b16 %v804, %v800
    %v1033 = vpack.c.b16 %v809, %v805
    %v1034 = vpack.c.b16 %v810, %v806
    %v1035 = vpack.c.b16 %v811, %v807
    %v1036 = vpack.c.b16 %v812, %v808
    %v1037 = vpack.c.b16 %v817, %v813
    %v1038 = vpack.c.b16 %v818, %v814
    %v1039 = vpack.c.b16 %v819, %v815
    %v1040 = vpack.c.b16 %v820, %v816
    %v1041 = vpack.c.b16 %v825, %v821
    %v1042 = vpack.c.b16 %v826, %v822
    %v1043 = vpack.c.b16 %v827, %v823
    %v1044 = vpack.c.b16 %v828, %v824
    %v1045 = vpack.c.b16 %v833, %v829
    %v1046 = vpack.c.b16 %v834, %v830
    %v1047 = vpack.c.b16 %v835, %v831
    %v1048 = vpack.c.b16 %v836, %v832
    %v1049 = vpack.c.b16 %v841, %v837
    %v1050 = vpack.c.b16 %v842, %v838
    %v1051 = vpack.c.b16 %v843, %v839
    %v1052 = vpack.c.b16 %v844, %v840
    %v1053 = vpack.c.b16 %v849, %v845
    %v1054 = vpack.c.b16 %v850, %v846
    %v1055 = vpack.c.b16 %v851, %v847
    %v1056 = vpack.c.b16 %v852, %v848
    %v1057 = vpack.c.b16 %v857, %v853
    %v1058 = vpack.c.b16 %v858, %v854
    %v1059 = vpack.c.b16 %v859, %v855
    %v1060 = vpack.c.b16 %v860, %v856
    %v1061 = vpack.c.b16 %v865, %v861
    %v1062 = vpack.c.b16 %v866, %v862
    %v1063 = vpack.c.b16 %v867, %v863
    %v1064 = vpack.c.b16 %v868, %v864
    %v1065 = vpack.c.b16 %v873, %v869
    %v1066 = vpack.c.b16 %v874, %v870
    %v1067 = vpack.c.b16 %v875, %v871
    %v1068 = vpack.c.b16 %v876, %v872
    %1261 = vmatpush.bf16.msra.mxu0 %v905
    %1262 = vmatpush.bf16.msra.mxu0 %v901
    %1263 = vmatpush.bf16.msra.mxu0 %v897
    %1264 = vmatpush.bf16.msra.mxu0 %v893
    %1265 = vmatpush.bf16.msra.mxu0 %v889
    %1266 = vmatpush.bf16.msra.mxu0 %v885
    %1267 = vmatpush.bf16.msra.mxu0 %v881
    %1268 = vmatpush.bf16.msra.mxu0 %v877
    %1269 = vmatmul.bf16.gmra.mxu0 %v93
    %v1270 = vpop.f32.mrf.mxu0
    %v1271 = vadd.f32 %v293, %v1270
    %v1272 = vpop.f32.mrf.mxu0
    %v1273 = vadd.f32 %v293, %v1272
    %1274 = vdwg.mxu0
    %1275 = vmatpush.bf16.msra.mxu0 %v937
    %1276 = vmatpush.bf16.msra.mxu0 %v933
    %1277 = vmatpush.bf16.msra.mxu0 %v929
    %1278 = vmatpush.bf16.msra.mxu0 %v925
    %1279 = vmatpush.bf16.msra.mxu0 %v921
    %1280 = vmatpush.bf16.msra.mxu0 %v917
    %1281 = vmatpush.bf16.msra.mxu0 %v913
    %1282 = vmatpush.bf16.msra.mxu0 %v909
    %1283 = vmatmul.bf16.gmra.mxu0 %v94
    %v1284 = vpop.f32.mrf.mxu0
    %v1285 = vadd.f32 %v1271, %v1284
    %v1286 = vpop.f32.mrf.mxu0
    %v1287 = vadd.f32 %v1273, %v1286
    %1288 = vdwg.mxu0
    %1289 = vmatpush.bf16.msra.mxu0 %v969
    %1290 = vmatpush.bf16.msra.mxu0 %v965
    %1291 = vmatpush.bf16.msra.mxu0 %v961
    %1292 = vmatpush.bf16.msra.mxu0 %v957
    %1293 = vmatpush.bf16.msra.mxu0 %v953
    %1294 = vmatpush.bf16.msra.mxu0 %v949
    %1295 = vmatpush.bf16.msra.mxu0 %v945
    %1296 = vmatpush.bf16.msra.mxu0 %v941
    %1297 = vmatmul.bf16.gmra.mxu0 %v95
    %v1298 = vpop.f32.mrf.mxu0
    %v1299 = vadd.f32 %v1285, %v1298
    %v1300 = vpop.f32.mrf.mxu0
    %v1301 = vadd.f32 %v1287, %v1300
    %1302 = vdwg.mxu0
    %1303 = vmatpush.bf16.msra.mxu0 %v1001
    %1304 = vmatpush.bf16.msra.mxu0 %v997
    %1305 = vmatpush.bf16.msra.mxu0 %v993
    %1306 = vmatpush.bf16.msra.mxu0 %v989
    %1307 = vmatpush.bf16.msra.mxu0 %v985
    %1308 = vmatpush.bf16.msra.mxu0 %v981
    %1309 = vmatpush.bf16.msra.mxu0 %v977
    %1310 = vmatpush.bf16.msra.mxu0 %v973
    %1311 = vmatmul.bf16.gmra.mxu0 %v96
    %v1312 = vpop.f32.mrf.mxu0
    %v1313 = vadd.f32 %v1299, %v1312
    %v1314 = vpop.f32.mrf.mxu0
    %v1315 = vadd.f32 %v1301, %v1314
    %1316 = vdwg.mxu0
    %1317 = vmatpush.bf16.msra.mxu0 %v1033
    %1318 = vmatpush.bf16.msra.mxu0 %v1029
    %1319 = vmatpush.bf16.msra.mxu0 %v1025
    %1320 = vmatpush.bf16.msra.mxu0 %v1021
    %1321 = vmatpush.bf16.msra.mxu0 %v1017
    %1322 = vmatpush.bf16.msra.mxu0 %v1013
    %1323 = vmatpush.bf16.msra.mxu0 %v1009
    %1324 = vmatpush.bf16.msra.mxu0 %v1005
    %1325 = vmatmul.bf16.gmra.mxu0 %v97
    %v1326 = vpop.f32.mrf.mxu0
    %v1327 = vadd.f32 %v1313, %v1326
    %v1328 = vpop.f32.mrf.mxu0
    %v1329 = vadd.f32 %v1315, %v1328
    %1330 = vdwg.mxu0
    %1331 = vmatpush.bf16.msra.mxu0 %v1065
    %1332 = vmatpush.bf16.msra.mxu0 %v1061
    %1333 = vmatpush.bf16.msra.mxu0 %v1057
    %1334 = vmatpush.bf16.msra.mxu0 %v1053
    %1335 = vmatpush.bf16.msra.mxu0 %v1049
    %1336 = vmatpush.bf16.msra.mxu0 %v1045
    %1337 = vmatpush.bf16.msra.mxu0 %v1041
    %1338 = vmatpush.bf16.msra.mxu0 %v1037
    %1339 = vmatmul.bf16.gmra.mxu0 %v98
    %v1340 = vpop.f32.mrf.mxu0
    %v1341 = vadd.f32 %v1327, %v1340
    %v1342 = vpop.f32.mrf.mxu0
    %v1343 = vadd.f32 %v1329, %v1342
    %1344 = vdwg.mxu0
    %1345 = vmatpush.bf16.msra.mxu0 %v906
    %1346 = vmatpush.bf16.msra.mxu0 %v902
    %1347 = vmatpush.bf16.msra.mxu0 %v898
    %1348 = vmatpush.bf16.msra.mxu0 %v894
    %1349 = vmatpush.bf16.msra.mxu0 %v890
    %1350 = vmatpush.bf16.msra.mxu0 %v886
    %1351 = vmatpush.bf16.msra.mxu0 %v882
    %1352 = vmatpush.bf16.msra.mxu0 %v878
    %1353 = vmatmul.bf16.gmra.mxu0 %v93
    %v1354 = vpop.f32.mrf.mxu0
    %v1355 = vadd.f32 %v294, %v1354
    %v1356 = vpop.f32.mrf.mxu0
    %v1357 = vadd.f32 %v294, %v1356
    %1358 = vdwg.mxu0
    %1359 = vmatpush.bf16.msra.mxu0 %v938
    %1360 = vmatpush.bf16.msra.mxu0 %v934
    %1361 = vmatpush.bf16.msra.mxu0 %v930
    %1362 = vmatpush.bf16.msra.mxu0 %v926
    %1363 = vmatpush.bf16.msra.mxu0 %v922
    %1364 = vmatpush.bf16.msra.mxu0 %v918
    %1365 = vmatpush.bf16.msra.mxu0 %v914
    %1366 = vmatpush.bf16.msra.mxu0 %v910
    %1367 = vmatmul.bf16.gmra.mxu0 %v94
    %v1368 = vpop.f32.mrf.mxu0
    %v1369 = vadd.f32 %v1355, %v1368
    %v1370 = vpop.f32.mrf.mxu0
    %v1371 = vadd.f32 %v1357, %v1370
    %1372 = vdwg.mxu0
    %1373 = vmatpush.bf16.msra.mxu0 %v970
    %1374 = vmatpush.bf16.msra.mxu0 %v966
    %1375 = vmatpush.bf16.msra.mxu0 %v962
    %1376 = vmatpush.bf16.msra.mxu0 %v958
    %1377 = vmatpush.bf16.msra.mxu0 %v954
    %1378 = vmatpush.bf16.msra.mxu0 %v950
    %1379 = vmatpush.bf16.msra.mxu0 %v946
    %1380 = vmatpush.bf16.msra.mxu0 %v942
    %1381 = vmatmul.bf16.gmra.mxu0 %v95
    %v1382 = vpop.f32.mrf.mxu0
    %v1383 = vadd.f32 %v1369, %v1382
    %v1384 = vpop.f32.mrf.mxu0
    %v1385 = vadd.f32 %v1371, %v1384
    %1386 = vdwg.mxu0
    %1387 = vmatpush.bf16.msra.mxu0 %v1002
    %1388 = vmatpush.bf16.msra.mxu0 %v998
    %1389 = vmatpush.bf16.msra.mxu0 %v994
    %1390 = vmatpush.bf16.msra.mxu0 %v990
    %1391 = vmatpush.bf16.msra.mxu0 %v986
    %1392 = vmatpush.bf16.msra.mxu0 %v982
    %1393 = vmatpush.bf16.msra.mxu0 %v978
    %1394 = vmatpush.bf16.msra.mxu0 %v974
    %1395 = vmatmul.bf16.gmra.mxu0 %v96
    %v1396 = vpop.f32.mrf.mxu0
    %v1397 = vadd.f32 %v1383, %v1396
    %v1398 = vpop.f32.mrf.mxu0
    %v1399 = vadd.f32 %v1385, %v1398
    %1400 = vdwg.mxu0
    %1401 = vmatpush.bf16.msra.mxu0 %v1034
    %1402 = vmatpush.bf16.msra.mxu0 %v1030
    %1403 = vmatpush.bf16.msra.mxu0 %v1026
    %1404 = vmatpush.bf16.msra.mxu0 %v1022
    %1405 = vmatpush.bf16.msra.mxu0 %v1018
    %1406 = vmatpush.bf16.msra.mxu0 %v1014
    %1407 = vmatpush.bf16.msra.mxu0 %v1010
    %1408 = vmatpush.bf16.msra.mxu0 %v1006
    %1409 = vmatmul.bf16.gmra.mxu0 %v97
    %v1410 = vpop.f32.mrf.mxu0
    %v1411 = vadd.f32 %v1397, %v1410
    %v1412 = vpop.f32.mrf.mxu0
    %v1413 = vadd.f32 %v1399, %v1412
    %1414 = vdwg.mxu0
    %1415 = vmatpush.bf16.msra.mxu0 %v1066
    %1416 = vmatpush.bf16.msra.mxu0 %v1062
    %1417 = vmatpush.bf16.msra.mxu0 %v1058
    %1418 = vmatpush.bf16.msra.mxu0 %v1054
    %1419 = vmatpush.bf16.msra.mxu0 %v1050
    %1420 = vmatpush.bf16.msra.mxu0 %v1046
    %1421 = vmatpush.bf16.msra.mxu0 %v1042
    %1422 = vmatpush.bf16.msra.mxu0 %v1038
    %1423 = vmatmul.bf16.gmra.mxu0 %v98
    %v1424 = vpop.f32.mrf.mxu0
    %v1425 = vadd.f32 %v1411, %v1424
    %v1426 = vpop.f32.mrf.mxu0
    %v1427 = vadd.f32 %v1413, %v1426
    %1428 = vdwg.mxu0
    %1429 = vmatpush.bf16.msra.mxu0 %v907
    %1430 = vmatpush.bf16.msra.mxu0 %v903
    %1431 = vmatpush.bf16.msra.mxu0 %v899
    %1432 = vmatpush.bf16.msra.mxu0 %v895
    %1433 = vmatpush.bf16.msra.mxu0 %v891
    %1434 = vmatpush.bf16.msra.mxu0 %v887
    %1435 = vmatpush.bf16.msra.mxu0 %v883
    %1436 = vmatpush.bf16.msra.mxu0 %v879
    %1437 = vmatmul.bf16.gmra.mxu0 %v93
    %v1438 = vpop.f32.mrf.mxu0
    %v1439 = vadd.f32 %v295, %v1438
    %v1440 = vpop.f32.mrf.mxu0
    %v1441 = vadd.f32 %v295, %v1440
    %1442 = vdwg.mxu0
    %1443 = vmatpush.bf16.msra.mxu0 %v939
    %1444 = vmatpush.bf16.msra.mxu0 %v935
    %1445 = vmatpush.bf16.msra.mxu0 %v931
    %1446 = vmatpush.bf16.msra.mxu0 %v927
    %1447 = vmatpush.bf16.msra.mxu0 %v923
    %1448 = vmatpush.bf16.msra.mxu0 %v919
    %1449 = vmatpush.bf16.msra.mxu0 %v915
    %1450 = vmatpush.bf16.msra.mxu0 %v911
    %1451 = vmatmul.bf16.gmra.mxu0 %v94
    %v1452 = vpop.f32.mrf.mxu0
    %v1453 = vadd.f32 %v1439, %v1452
    %v1454 = vpop.f32.mrf.mxu0
    %v1455 = vadd.f32 %v1441, %v1454
    %1456 = vdwg.mxu0
    %1457 = vmatpush.bf16.msra.mxu0 %v971
    %1458 = vmatpush.bf16.msra.mxu0 %v967
    %1459 = vmatpush.bf16.msra.mxu0 %v963
    %1460 = vmatpush.bf16.msra.mxu0 %v959
    %1461 = vmatpush.bf16.msra.mxu0 %v955
    %1462 = vmatpush.bf16.msra.mxu0 %v951
    %1463 = vmatpush.bf16.msra.mxu0 %v947
    %1464 = vmatpush.bf16.msra.mxu0 %v943
    %1465 = vmatmul.bf16.gmra.mxu0 %v95
    %v1466 = vpop.f32.mrf.mxu0
    %v1467 = vadd.f32 %v1453, %v1466
    %v1468 = vpop.f32.mrf.mxu0
    %v1469 = vadd.f32 %v1455, %v1468
    %1470 = vdwg.mxu0
    %1471 = vmatpush.bf16.msra.mxu0 %v1003
    %1472 = vmatpush.bf16.msra.mxu0 %v999
    %1473 = vmatpush.bf16.msra.mxu0 %v995
    %1474 = vmatpush.bf16.msra.mxu0 %v991
    %1475 = vmatpush.bf16.msra.mxu0 %v987
    %1476 = vmatpush.bf16.msra.mxu0 %v983
    %1477 = vmatpush.bf16.msra.mxu0 %v979
    %1478 = vmatpush.bf16.msra.mxu0 %v975
    %1479 = vmatmul.bf16.gmra.mxu0 %v96
    %v1480 = vpop.f32.mrf.mxu0
    %v1481 = vadd.f32 %v1467, %v1480
    %v1482 = vpop.f32.mrf.mxu0
    %v1483 = vadd.f32 %v1469, %v1482
    %1484 = vdwg.mxu0
    %1485 = vmatpush.bf16.msra.mxu0 %v1035
    %1486 = vmatpush.bf16.msra.mxu0 %v1031
    %1487 = vmatpush.bf16.msra.mxu0 %v1027
    %1488 = vmatpush.bf16.msra.mxu0 %v1023
    %1489 = vmatpush.bf16.msra.mxu0 %v1019
    %1490 = vmatpush.bf16.msra.mxu0 %v1015
    %1491 = vmatpush.bf16.msra.mxu0 %v1011
    %1492 = vmatpush.bf16.msra.mxu0 %v1007
    %1493 = vmatmul.bf16.gmra.mxu0 %v97
    %v1494 = vpop.f32.mrf.mxu0
    %v1495 = vadd.f32 %v1481, %v1494
    %v1496 = vpop.f32.mrf.mxu0
    %v1497 = vadd.f32 %v1483, %v1496
    %1498 = vdwg.mxu0
    %1499 = vmatpush.bf16.msra.mxu0 %v1067
    %1500 = vmatpush.bf16.msra.mxu0 %v1063
    %1501 = vmatpush.bf16.msra.mxu0 %v1059
    %1502 = vmatpush.bf16.msra.mxu0 %v1055
    %1503 = vmatpush.bf16.msra.mxu0 %v1051
    %1504 = vmatpush.bf16.msra.mxu0 %v1047
    %1505 = vmatpush.bf16.msra.mxu0 %v1043
    %1506 = vmatpush.bf16.msra.mxu0 %v1039
    %1507 = vmatmul.bf16.gmra.mxu0 %v98
    %v1508 = vpop.f32.mrf.mxu0
    %v1509 = vadd.f32 %v1495, %v1508
    %v1510 = vpop.f32.mrf.mxu0
    %v1511 = vadd.f32 %v1497, %v1510
    %1512 = vdwg.mxu0
    %1513 = vmatpush.bf16.msra.mxu0 %v908
    %1514 = vmatpush.bf16.msra.mxu0 %v904
    %1515 = vmatpush.bf16.msra.mxu0 %v900
    %1516 = vmatpush.bf16.msra.mxu0 %v896
    %1517 = vmatpush.bf16.msra.mxu0 %v892
    %1518 = vmatpush.bf16.msra.mxu0 %v888
    %1519 = vmatpush.bf16.msra.mxu0 %v884
    %1520 = vmatpush.bf16.msra.mxu0 %v880
    %1521 = vmatmul.bf16.gmra.mxu0 %v93
    %v1522 = vpop.f32.mrf.mxu0
    %v1523 = vadd.f32 %v296, %v1522
    %v1524 = vpop.f32.mrf.mxu0
    %v1525 = vadd.f32 %v296, %v1524
    %1526 = vdwg.mxu0
    %1527 = vmatpush.bf16.msra.mxu0 %v940
    %1528 = vmatpush.bf16.msra.mxu0 %v936
    %1529 = vmatpush.bf16.msra.mxu0 %v932
    %1530 = vmatpush.bf16.msra.mxu0 %v928
    %1531 = vmatpush.bf16.msra.mxu0 %v924
    %1532 = vmatpush.bf16.msra.mxu0 %v920
    %1533 = vmatpush.bf16.msra.mxu0 %v916
    %1534 = vmatpush.bf16.msra.mxu0 %v912
    %1535 = vmatmul.bf16.gmra.mxu0 %v94
    %v1536 = vpop.f32.mrf.mxu0
    %v1537 = vadd.f32 %v1523, %v1536
    %v1538 = vpop.f32.mrf.mxu0
    %v1539 = vadd.f32 %v1525, %v1538
    %1540 = vdwg.mxu0
    %1541 = vmatpush.bf16.msra.mxu0 %v972
    %1542 = vmatpush.bf16.msra.mxu0 %v968
    %1543 = vmatpush.bf16.msra.mxu0 %v964
    %1544 = vmatpush.bf16.msra.mxu0 %v960
    %1545 = vmatpush.bf16.msra.mxu0 %v956
    %1546 = vmatpush.bf16.msra.mxu0 %v952
    %1547 = vmatpush.bf16.msra.mxu0 %v948
    %1548 = vmatpush.bf16.msra.mxu0 %v944
    %1549 = vmatmul.bf16.gmra.mxu0 %v95
    %v1550 = vpop.f32.mrf.mxu0
    %v1551 = vadd.f32 %v1537, %v1550
    %v1552 = vpop.f32.mrf.mxu0
    %v1553 = vadd.f32 %v1539, %v1552
    %1554 = vdwg.mxu0
    %1555 = vmatpush.bf16.msra.mxu0 %v1004
    %1556 = vmatpush.bf16.msra.mxu0 %v1000
    %1557 = vmatpush.bf16.msra.mxu0 %v996
    %1558 = vmatpush.bf16.msra.mxu0 %v992
    %1559 = vmatpush.bf16.msra.mxu0 %v988
    %1560 = vmatpush.bf16.msra.mxu0 %v984
    %1561 = vmatpush.bf16.msra.mxu0 %v980
    %1562 = vmatpush.bf16.msra.mxu0 %v976
    %1563 = vmatmul.bf16.gmra.mxu0 %v96
    %v1564 = vpop.f32.mrf.mxu0
    %v1565 = vadd.f32 %v1551, %v1564
    %v1566 = vpop.f32.mrf.mxu0
    %v1567 = vadd.f32 %v1553, %v1566
    %1568 = vdwg.mxu0
    %1569 = vmatpush.bf16.msra.mxu0 %v1036
    %1570 = vmatpush.bf16.msra.mxu0 %v1032
    %1571 = vmatpush.bf16.msra.mxu0 %v1028
    %1572 = vmatpush.bf16.msra.mxu0 %v1024
    %1573 = vmatpush.bf16.msra.mxu0 %v1020
    %1574 = vmatpush.bf16.msra.mxu0 %v1016
    %1575 = vmatpush.bf16.msra.mxu0 %v1012
    %1576 = vmatpush.bf16.msra.mxu0 %v1008
    %1577 = vmatmul.bf16.gmra.mxu0 %v97
    %v1578 = vpop.f32.mrf.mxu0
    %v1579 = vadd.f32 %v1565, %v1578
    %v1580 = vpop.f32.mrf.mxu0
    %v1581 = vadd.f32 %v1567, %v1580
    %1582 = vdwg.mxu0
    %1583 = vmatpush.bf16.msra.mxu0 %v1068
    %1584 = vmatpush.bf16.msra.mxu0 %v1064
    %1585 = vmatpush.bf16.msra.mxu0 %v1060
    %1586 = vmatpush.bf16.msra.mxu0 %v1056
    %1587 = vmatpush.bf16.msra.mxu0 %v1052
    %1588 = vmatpush.bf16.msra.mxu0 %v1048
    %1589 = vmatpush.bf16.msra.mxu0 %v1044
    %1590 = vmatpush.bf16.msra.mxu0 %v1040
    %1591 = vmatmul.bf16.gmra.mxu0 %v98
    %v1592 = vpop.f32.mrf.mxu0
    %v1593 = vadd.f32 %v1579, %v1592
    %v1594 = vpop.f32.mrf.mxu0
    %v1595 = vadd.f32 %v1581, %v1594
    %1596 = vdwg.mxu0
    %v1597 = vmax.f32 %v1341, 0.0
    %v1598 = vmax.f32 %v1425, 0.0
    %v1599 = vmax.f32 %v1509, 0.0
    %v1600 = vmax.f32 %v1593, 0.0
    %v1601 = vmax.f32 %v1343, 0.0
    %v1602 = vmax.f32 %v1427, 0.0
    %v1603 = vmax.f32 %v1511, 0.0
    %v1604 = vmax.f32 %v1595, 0.0
    %v1605 = vpack.c.bf16 %v1601, %v1597
    %v1606 = vpack.c.bf16 %v1602, %v1598
    %v1607 = vpack.c.bf16 %v1603, %v1599
    %v1608 = vpack.c.bf16 %v1604, %v1600
    %v1609 = vld [vmem:[#allocation7] sm:$0xf]
    %v1610 = vld [vmem:[#allocation7 + $0x4] sm:$0xf]
    %v1611 = vld [vmem:[#allocation7 + $0x8] sm:$0xf]
    %v1612 = vld [vmem:[#allocation7 + $0xc] sm:$0xf]
    %v1613 = vld [vmem:[#allocation7 + $0x10] sm:$0xf]
    %v1614 = vld [vmem:[#allocation7 + $0x14] sm:$0xf]
    %v1615 = vld [vmem:[#allocation7 + $0x18] sm:$0xf]
    %v1616 = vld [vmem:[#allocation7 + $0x1c] sm:$0xf]
    %v1617 = vld [vmem:[#allocation7 + $0x20] sm:$0xf]
    %v1618 = vld [vmem:[#allocation7 + $0x24] sm:$0xf]
    %v1619 = vld [vmem:[#allocation7 + $0x28] sm:$0xf]
    %v1620 = vld [vmem:[#allocation7 + $0x2c] sm:$0xf]
    %v1621 = vld [vmem:[#allocation7 + $0x30] sm:$0xf]
    %v1622 = vld [vmem:[#allocation7 + $0x34] sm:$0xf]
    %v1623 = vld [vmem:[#allocation7 + $0x38] sm:$0xf]
    %v1624 = vld [vmem:[#allocation7 + $0x3c] sm:$0xf]
    %v1625 = vld [vmem:[#allocation7 + $0x40] sm:$0xf]
    %v1626 = vld [vmem:[#allocation7 + $0x44] sm:$0xf]
    %v1627 = vld [vmem:[#allocation7 + $0x48] sm:$0xf]
    %v1628 = vld [vmem:[#allocation7 + $0x4c] sm:$0xf]
    %v1629 = vld [vmem:[#allocation7 + $0x50] sm:$0xf]
    %v1630 = vld [vmem:[#allocation7 + $0x54] sm:$0xf]
    %v1631 = vld [vmem:[#allocation7 + $0x58] sm:$0xf]
    %v1632 = vld [vmem:[#allocation7 + $0x5c] sm:$0xf]
    %v1633 = vld [vmem:[#allocation7 + $0x60] sm:$0xf]
    %v1634 = vld [vmem:[#allocation7 + $0x64] sm:$0xf]
    %v1635 = vld [vmem:[#allocation7 + $0x68] sm:$0xf]
    %v1636 = vld [vmem:[#allocation7 + $0x6c] sm:$0xf]
    %v1637 = vld [vmem:[#allocation7 + $0x70] sm:$0xf]
    %v1638 = vld [vmem:[#allocation7 + $0x74] sm:$0xf]
    %v1639 = vld [vmem:[#allocation7 + $0x78] sm:$0xf]
    %v1640 = vld [vmem:[#allocation7 + $0x7c] sm:$0xf]
    %v1641 = vld [vmem:[#allocation7 + $0x80] sm:$0xf]
    %v1642 = vld [vmem:[#allocation7 + $0x84] sm:$0xf]
    %v1643 = vld [vmem:[#allocation7 + $0x88] sm:$0xf]
    %v1644 = vld [vmem:[#allocation7 + $0x8c] sm:$0xf]
    %v1645 = vld [vmem:[#allocation7 + $0x90] sm:$0xf]
    %v1646 = vld [vmem:[#allocation7 + $0x94] sm:$0xf]
    %v1647 = vld [vmem:[#allocation7 + $0x98] sm:$0xf]
    %v1648 = vld [vmem:[#allocation7 + $0x9c] sm:$0xf]
    %v1649 = vld [vmem:[#allocation7 + $0xa0] sm:$0xf]
    %v1650 = vld [vmem:[#allocation7 + $0xa4] sm:$0xf]
    %v1651 = vld [vmem:[#allocation7 + $0xa8] sm:$0xf]
    %v1652 = vld [vmem:[#allocation7 + $0xac] sm:$0xf]
    %v1653 = vld [vmem:[#allocation7 + $0xb0] sm:$0xf]
    %v1654 = vld [vmem:[#allocation7 + $0xb4] sm:$0xf]
    %v1655 = vld [vmem:[#allocation7 + $0xb8] sm:$0xf]
    %v1656 = vld [vmem:[#allocation7 + $0xbc] sm:$0xf]
    %v1657 = vld [vmem:[#allocation7 + $0xc0] sm:$0xf]
    %v1658 = vld [vmem:[#allocation7 + $0xc4] sm:$0xf]
    %v1659 = vld [vmem:[#allocation7 + $0xc8] sm:$0xf]
    %v1660 = vld [vmem:[#allocation7 + $0xcc] sm:$0xf]
    %v1661 = vld [vmem:[#allocation7 + $0xd0] sm:$0xf]
    %v1662 = vld [vmem:[#allocation7 + $0xd4] sm:$0xf]
    %v1663 = vld [vmem:[#allocation7 + $0xd8] sm:$0xf]
    %v1664 = vld [vmem:[#allocation7 + $0xdc] sm:$0xf]
    %v1665 = vld [vmem:[#allocation7 + $0xe0] sm:$0xf]
    %v1666 = vld [vmem:[#allocation7 + $0xe4] sm:$0xf]
    %v1667 = vld [vmem:[#allocation7 + $0xe8] sm:$0xf]
    %v1668 = vld [vmem:[#allocation7 + $0xec] sm:$0xf]
    %v1669 = vld [vmem:[#allocation7 + $0xf0] sm:$0xf]
    %v1670 = vld [vmem:[#allocation7 + $0xf4] sm:$0xf]
    %v1671 = vld [vmem:[#allocation7 + $0xf8] sm:$0xf]
    %v1672 = vld [vmem:[#allocation7 + $0xfc] sm:$0xf]
    %v1673 = vld [vmem:[%s4] sm:$0x1]
    %v1675 = vperm.slane %v1673, 0
    %v1741 = vunpack.c.l.b16 %v1609
    %v1742 = vunpack.c.l.b16 %v1610
    %v1743 = vunpack.c.l.b16 %v1611
    %v1744 = vunpack.c.l.b16 %v1612
    %v1745 = vunpack.c.l.b16 %v1613
    %v1746 = vunpack.c.l.b16 %v1614
    %v1747 = vunpack.c.l.b16 %v1615
    %v1748 = vunpack.c.l.b16 %v1616
    %v1749 = vunpack.c.l.b16 %v1617
    %v1750 = vunpack.c.l.b16 %v1618
    %v1751 = vunpack.c.l.b16 %v1619
    %v1752 = vunpack.c.l.b16 %v1620
    %v1753 = vunpack.c.l.b16 %v1621
    %v1754 = vunpack.c.l.b16 %v1622
    %v1755 = vunpack.c.l.b16 %v1623
    %v1756 = vunpack.c.l.b16 %v1624
    %v1757 = vunpack.c.l.b16 %v1625
    %v1758 = vunpack.c.l.b16 %v1626
    %v1759 = vunpack.c.l.b16 %v1627
    %v1760 = vunpack.c.l.b16 %v1628
    %v1761 = vunpack.c.l.b16 %v1629
    %v1762 = vunpack.c.l.b16 %v1630
    %v1763 = vunpack.c.l.b16 %v1631
    %v1764 = vunpack.c.l.b16 %v1632
    %v1765 = vunpack.c.l.b16 %v1633
    %v1766 = vunpack.c.l.b16 %v1634
    %v1767 = vunpack.c.l.b16 %v1635
    %v1768 = vunpack.c.l.b16 %v1636
    %v1769 = vunpack.c.l.b16 %v1637
    %v1770 = vunpack.c.l.b16 %v1638
    %v1771 = vunpack.c.l.b16 %v1639
    %v1772 = vunpack.c.l.b16 %v1640
    %v1773 = vunpack.c.l.b16 %v1641
    %v1774 = vunpack.c.l.b16 %v1642
    %v1775 = vunpack.c.l.b16 %v1643
    %v1776 = vunpack.c.l.b16 %v1644
    %v1777 = vunpack.c.l.b16 %v1645
    %v1778 = vunpack.c.l.b16 %v1646
    %v1779 = vunpack.c.l.b16 %v1647
    %v1780 = vunpack.c.l.b16 %v1648
    %v1781 = vunpack.c.l.b16 %v1649
    %v1782 = vunpack.c.l.b16 %v1650
    %v1783 = vunpack.c.l.b16 %v1651
    %v1784 = vunpack.c.l.b16 %v1652
    %v1785 = vunpack.c.l.b16 %v1653
    %v1786 = vunpack.c.l.b16 %v1654
    %v1787 = vunpack.c.l.b16 %v1655
    %v1788 = vunpack.c.l.b16 %v1656
    %v1789 = vunpack.c.l.b16 %v1657
    %v1790 = vunpack.c.l.b16 %v1658
    %v1791 = vunpack.c.l.b16 %v1659
    %v1792 = vunpack.c.l.b16 %v1660
    %v1793 = vunpack.c.l.b16 %v1661
    %v1794 = vunpack.c.l.b16 %v1662
    %v1795 = vunpack.c.l.b16 %v1663
    %v1796 = vunpack.c.l.b16 %v1664
    %v1797 = vunpack.c.l.b16 %v1665
    %v1798 = vunpack.c.l.b16 %v1666
    %v1799 = vunpack.c.l.b16 %v1667
    %v1800 = vunpack.c.l.b16 %v1668
    %v1801 = vunpack.c.l.b16 %v1669
    %v1802 = vunpack.c.l.b16 %v1670
    %v1803 = vunpack.c.l.b16 %v1671
    %v1804 = vunpack.c.l.b16 %v1672
    %v1805 = vpack.c.b16 %v1742, %v1741
    %v1806 = vpack.c.b16 %v1744, %v1743
    %v1807 = vpack.c.b16 %v1746, %v1745
    %v1808 = vpack.c.b16 %v1748, %v1747
    %v1809 = vpack.c.b16 %v1750, %v1749
    %v1810 = vpack.c.b16 %v1752, %v1751
    %v1811 = vpack.c.b16 %v1754, %v1753
    %v1812 = vpack.c.b16 %v1756, %v1755
    %v1813 = vpack.c.b16 %v1758, %v1757
    %v1814 = vpack.c.b16 %v1760, %v1759
    %v1815 = vpack.c.b16 %v1762, %v1761
    %v1816 = vpack.c.b16 %v1764, %v1763
    %v1817 = vpack.c.b16 %v1766, %v1765
    %v1818 = vpack.c.b16 %v1768, %v1767
    %v1819 = vpack.c.b16 %v1770, %v1769
    %v1820 = vpack.c.b16 %v1772, %v1771
    %v1821 = vpack.c.b16 %v1774, %v1773
    %v1822 = vpack.c.b16 %v1776, %v1775
    %v1823 = vpack.c.b16 %v1778, %v1777
    %v1824 = vpack.c.b16 %v1780, %v1779
    %v1825 = vpack.c.b16 %v1782, %v1781
    %v1826 = vpack.c.b16 %v1784, %v1783
    %v1827 = vpack.c.b16 %v1786, %v1785
    %v1828 = vpack.c.b16 %v1788, %v1787
    %v1829 = vpack.c.b16 %v1790, %v1789
    %v1830 = vpack.c.b16 %v1792, %v1791
    %v1831 = vpack.c.b16 %v1794, %v1793
    %v1832 = vpack.c.b16 %v1796, %v1795
    %v1833 = vpack.c.b16 %v1798, %v1797
    %v1834 = vpack.c.b16 %v1800, %v1799
    %v1835 = vpack.c.b16 %v1802, %v1801
    %v1836 = vpack.c.b16 %v1804, %v1803
    %1869 = vmatpush.bf16.msra.mxu0 %v1812
    %1870 = vmatpush.bf16.msra.mxu0 %v1811
    %1871 = vmatpush.bf16.msra.mxu0 %v1810
    %1872 = vmatpush.bf16.msra.mxu0 %v1809
    %1873 = vmatpush.bf16.msra.mxu0 %v1808
    %1874 = vmatpush.bf16.msra.mxu0 %v1807
    %1875 = vmatpush.bf16.msra.mxu0 %v1806
    %1876 = vmatpush.bf16.msra.mxu0 %v1805
    %1877 = vmatmul.bf16.gmra.mxu0 %v1605
    %v1878 = vpop.f32.mrf.mxu0
    %v1879 = vadd.f32 %v1675, %v1878
    %v1880 = vpop.f32.mrf.mxu0
    %v1881 = vadd.f32 %v1675, %v1880
    %1882 = vdwg.mxu0
    %1883 = vmatpush.bf16.msra.mxu0 %v1820
    %1884 = vmatpush.bf16.msra.mxu0 %v1819
    %1885 = vmatpush.bf16.msra.mxu0 %v1818
    %1886 = vmatpush.bf16.msra.mxu0 %v1817
    %1887 = vmatpush.bf16.msra.mxu0 %v1816
    %1888 = vmatpush.bf16.msra.mxu0 %v1815
    %1889 = vmatpush.bf16.msra.mxu0 %v1814
    %1890 = vmatpush.bf16.msra.mxu0 %v1813
    %1891 = vmatmul.bf16.gmra.mxu0 %v1606
    %v1892 = vpop.f32.mrf.mxu0
    %v1893 = vadd.f32 %v1879, %v1892
    %v1894 = vpop.f32.mrf.mxu0
    %v1895 = vadd.f32 %v1881, %v1894
    %1896 = vdwg.mxu0
    %1897 = vmatpush.bf16.msra.mxu0 %v1828
    %1898 = vmatpush.bf16.msra.mxu0 %v1827
    %1899 = vmatpush.bf16.msra.mxu0 %v1826
    %1900 = vmatpush.bf16.msra.mxu0 %v1825
    %1901 = vmatpush.bf16.msra.mxu0 %v1824
    %1902 = vmatpush.bf16.msra.mxu0 %v1823
    %1903 = vmatpush.bf16.msra.mxu0 %v1822
    %1904 = vmatpush.bf16.msra.mxu0 %v1821
    %1905 = vmatmul.bf16.gmra.mxu0 %v1607
    %v1906 = vpop.f32.mrf.mxu0
    %v1907 = vadd.f32 %v1893, %v1906
    %v1908 = vpop.f32.mrf.mxu0
    %v1909 = vadd.f32 %v1895, %v1908
    %1910 = vdwg.mxu0
    %1911 = vmatpush.bf16.msra.mxu0 %v1836
    %1912 = vmatpush.bf16.msra.mxu0 %v1835
    %1913 = vmatpush.bf16.msra.mxu0 %v1834
    %1914 = vmatpush.bf16.msra.mxu0 %v1833
    %1915 = vmatpush.bf16.msra.mxu0 %v1832
    %1916 = vmatpush.bf16.msra.mxu0 %v1831
    %1917 = vmatpush.bf16.msra.mxu0 %v1830
    %1918 = vmatpush.bf16.msra.mxu0 %v1829
    %1919 = vmatmul.bf16.gmra.mxu0 %v1608
    %v1920 = vpop.f32.mrf.mxu0
    %v1921 = vadd.f32 %v1907, %v1920
    %v1922 = vpop.f32.mrf.mxu0
    %v1923 = vadd.f32 %v1909, %v1922
    %1924 = vdwg.mxu0
    %1925 = vmax.xlane.f32.xlu0 %v1921
    %v1926 = vpop.xlane.xlu0 %1925
    %1927 = vmax.xlane.f32.xlu0 %v1923
    %v1928 = vpop.xlane.xlu0 %1927
    %v1929 = vsub.f32 %v1921, %v1926
    %v1930 = vsub.f32 %v1923, %v1928
    %v1931 = vmul.f32 %v1929, 1.442695
    %v1932 = vpow.pop %v1931
    %v1933 = vmul.f32 %v1930, 1.442695
    %v1934 = vpow.pop %v1933
    %1935 = vadd.xlane.f32.xlu0 %v1932
    %v1936 = vpop.xlane.xlu0 %1935
    %1937 = vadd.xlane.f32.xlu0 %v1934
    %v1938 = vpop.xlane.xlu0 %1937
    %v1939 = vlog2.pop %v1936
    %v1940 = vmul.f32 %v1939, 0.6931472
    %v1941 = vlog2.pop %v1938
    %v1942 = vmul.f32 %v1941, 0.6931472
    %v1943 = vsub.f32 %v1929, %v1940
    %v1944 = vsub.f32 %v1930, %v1942
    %vm1945 = vcmask 64512
    %1946 = vst.msk [vmem:[%s5] sm:$0xff] %vm1945, %v1943
    %1947 = vst.msk [vmem:[%s5 + $0x8] sm:$0xff] %vm1945, %v1944
    // Predicated region
    $region38: #{tpu_custom_call.1} parent=1 // pred_check
      _
    $region39: #{tpu_custom_call.1} parent=1 // pred_check_branch
      %1949 = sbr.rel (0) target = $region41
    $region40: #{tpu_custom_call.1} parent=1 // pred_region
      _
    $region41: #{tpu_custom_call.1} parent=1 // pred_fallthru
      _
    // Predicated region
    $region42: #{tpu_custom_call.1} parent=1 // pred_check
      _
    $region43: #{tpu_custom_call.1} parent=1 // pred_check_branch
      %1951 = sbr.rel (0) target = $region45
    $region44: #{tpu_custom_call.1} parent=1 // pred_region
      _
    $region45: #{tpu_custom_call.1} parent=1 // pred_fallthru
      _
    %1952 = vsyncpa [#allocation3], 1
    %1953 = vsyncpa [#allocation5], 1
    %1954 = vsyncpa [#allocation8], 1

</llo_original>
